<compile_context>
chip_gen: v7x
topology: tpu7x:2x2x1
jax: 0.10.0
libtpu: 0.0.40
codegen_flags: <defaults>
</compile_context>

<pallas_src>
import jax
import jax.numpy as jnp
from jax.experimental import pallas as pl
from jax.experimental.pallas import tpu as pltpu


def _round_up(x, m):
    return ((x + m - 1) // m) * m


def _cdiv(a, b):
    return (a + b - 1) // b


def _make_pool_kernel(N, tN, tiles_per_split, Gp):
    """Streaming per-graph segment-sum over node tiles.

    Grid: (num_splits, tiles_per_split); axis 0 "parallel", axis 1 "arbitrary".

    batch_ref : (1, tN)  int32    graph id per node (lanes past N are garbage -> masked)
    x_ref     : (tN, D)  f32/bf16 node features   (rows  past N are garbage -> masked)
    psum_ref  : (Gp, D)  f32      per-split feature sums (leading split dim squeezed)
    pcnt_ref  : (Gp, 1)  f32      per-split node counts
    acc_ref   : (Gp, D)  f32      scratch accumulator (resident across the node axis)
    cnt_ref   : (Gp, 1)  f32      scratch counts
    """

    def kernel(batch_ref, x_ref, psum_ref, pcnt_ref, acc_ref, cnt_ref):
        c = pl.program_id(0)
        k = pl.program_id(1)

        @pl.when(k == 0)
        def _init():
            acc_ref[...] = jnp.zeros_like(acc_ref)
            cnt_ref[...] = jnp.zeros_like(cnt_ref)

        tile = c * tiles_per_split + k          # logical node-tile index
        remaining = N - tile * tN               # number of valid rows here (may be <= 0)

        # One-hot (graph x node) mask; lanes past the real node range contribute
        # neither sums nor counts.
        batch = batch_ref[...]                                           # (1, tN)
        gids = jax.lax.broadcasted_iota(jnp.int32, (Gp, tN), 0)
        lanes = jax.lax.broadcasted_iota(jnp.int32, (Gp, tN), 1)
        onehot = jnp.where((gids == batch) & (lanes < remaining), 1.0, 0.0)  # (Gp, tN) f32

        # Zero invalid rows of x: the boundary block's out-of-range rows are undefined,
        # and 0 * NaN would otherwise poison the matmul accumulator.
        xv = x_ref[...]
        rows = jax.lax.broadcasted_iota(jnp.int32, xv.shape, 0)
        xv = jnp.where(rows < remaining, xv, jnp.zeros_like(xv))

        # Segment-sum of this node tile expressed as an MXU matmul.
        acc_ref[...] += jnp.dot(onehot.astype(xv.dtype), xv,
                                preferred_element_type=jnp.float32,
                                precision=jax.lax.Precision.HIGHEST)
        cnt_ref[...] += jnp.sum(onehot, axis=1, keepdims=True)

        @pl.when(k == tiles_per_split - 1)
        def _finalize():
            psum_ref[...] = acc_ref[...]
            pcnt_ref[...] = cnt_ref[...]

    return kernel


def _mlp_head_kernel(psum_ref, pcnt_ref, w1_ref, b1_ref, w2_ref, b2_ref, out_ref):
    """Combine per-split partials, segment-mean, and post_mp MLP (Linear->ReLU->Linear)."""
    sums = jnp.sum(psum_ref[...], axis=0)          # (Gp, D)
    cnts = jnp.sum(pcnt_ref[...], axis=0)          # (Gp, 1)
    pooled = sums * pl.reciprocal(jnp.maximum(cnts, 1.0), approx=False)
    h = jnp.dot(pooled, w1_ref[...], preferred_element_type=jnp.float32) + b1_ref[...]
    h = jnp.maximum(h, 0.0)
    out = jnp.dot(h, w2_ref[...], preferred_element_type=jnp.float32) + b2_ref[...]
    out_ref[...] = out.astype(out_ref.dtype)


def _auto_node_tile(N, D, Gp, itemsize):
    # ~2 MiB of streamed x per grid step (>> the ~0.35 us fixed per-step overhead),
    # capped so the in-kernel (Gp, tN) one-hot mask stays modest.
    by_stream = (2 * 1024 * 1024) // max(D * itemsize, 1)
    by_mask = (2 * 1024 * 1024) // max(Gp * 4, 1)
    return max(512, min(by_stream, by_mask, 8192))


def gnn_graph_head(x, batch_idx, num_graphs, params, labels, *,
                   node_tile=None, num_splits=1):
    """JAX wrapper: returns (pred, label) like GNNGraphHead.forward.

    num_splits: split the node stream over a leading "parallel" grid axis; set 2 on
    v7x (2 TensorCores/chip) so both cores' DMA engines pull on the HBM stream.
    """
    N, D = x.shape
    w1, b1, w2, b2 = params
    H = w1.shape[1]
    O = w2.shape[1]
    Gp = _round_up(max(num_graphs, 1), 8)
    itemsize = jnp.dtype(x.dtype).itemsize

    if node_tile is None:
        node_tile = _auto_node_tile(N, D, Gp, itemsize)
    tN = _round_up(min(node_tile, _round_up(N, 128)), 128)
    n_tiles = _cdiv(N, tN)
    num_splits = max(1, min(num_splits, n_tiles))
    tiles_per_split = _cdiv(n_tiles, num_splits)
    # Clamp block indices so a (rounding-induced) tile fully past N never issues a
    # fully out-of-bounds DMA; its contribution is masked to zero in-kernel anyway.
    max_blk = max((N - 1) // tN, 0)

    batch2d = batch_idx.astype(jnp.int32).reshape(1, N)
    w1f = w1.astype(jnp.float32)
    b1r = b1.astype(jnp.float32).reshape(1, H)
    w2f = w2.astype(jnp.float32)
    b2r = b2.astype(jnp.float32).reshape(1, O)

    flops = (2 * Gp * num_splits * tiles_per_split * tN * D
             + 2 * Gp * D * H + 2 * Gp * H * O)
    bytes_accessed = int(N * D * itemsize + 4 * N + 4 * num_splits * Gp * (D + 1))
    cost = pl.CostEstimate(flops=flops, transcendentals=0,
                           bytes_accessed=bytes_accessed)

    def batch_map(c, k):
        return (0, jnp.minimum(c * tiles_per_split + k, max_blk))

    def x_map(c, k):
        return (jnp.minimum(c * tiles_per_split + k, max_blk), 0)

    psum, pcnt = pl.pallas_call(
        _make_pool_kernel(N, tN, tiles_per_split, Gp),
        out_shape=(jax.ShapeDtypeStruct((num_splits, Gp, D), jnp.float32),
                   jax.ShapeDtypeStruct((num_splits, Gp, 1), jnp.float32)),
        grid_spec=pltpu.PrefetchScalarGridSpec(
            num_scalar_prefetch=0,
            grid=(num_splits, tiles_per_split),
            in_specs=[
                pl.BlockSpec((1, tN), batch_map),      # graph ids, streamed per node tile
                pl.BlockSpec((tN, D), x_map),          # x, streamed UNPADDED per node tile
            ],
            out_specs=[
                pl.BlockSpec((None, Gp, D), lambda c, k: (c, 0, 0)),   # partial sums
                pl.BlockSpec((None, Gp, 1), lambda c, k: (c, 0, 0)),   # partial counts
            ],
            scratch_shapes=[
                pltpu.VMEM((Gp, D), jnp.float32),      # per-split feature-sum accumulator
                pltpu.VMEM((Gp, 1), jnp.float32),      # per-split node-count accumulator
            ],
        ),
        compiler_params=pltpu.CompilerParams(
            dimension_semantics=("parallel", "arbitrary")),
        cost_estimate=cost,
    )(batch2d, x)

    # Tiny combine + post_mp MLP kernel; all operands fit in VMEM as whole arrays.
    pred_p = pl.pallas_call(
        _mlp_head_kernel,
        out_shape=jax.ShapeDtypeStruct((Gp, O), jnp.float32),
    )(psum, pcnt, w1f, b1r, w2f, b2r)

    pred = pred_p[:num_graphs]
    return pred, labels


def _reference(x, batch_idx, num_graphs, params):
    """Pure-JAX reference for correctness checking."""
    w1, b1, w2, b2 = params
    sums = jax.ops.segment_sum(x, batch_idx, num_segments=num_graphs)
    cnts = jax.ops.segment_sum(jnp.ones((x.shape[0], 1), x.dtype), batch_idx,
                               num_segments=num_graphs)
    pooled = sums / jnp.maximum(cnts, 1.0)
    h = jnp.maximum(pooled @ w1 + b1, 0.0)
    return h @ w2 + b2


if __name__ == "__main__":
    key = jax.random.PRNGKey(0)
    k_x, k_w1, k_b1, k_w2, k_b2, k_lbl = jax.random.split(key, 6)

    dim_in = 32          # node / graph embedding dim
    dim_out = 8          # prediction dim

    # Graphs with uneven node counts (sum = 384 nodes).
    graph_sizes = [100, 50, 84, 70, 80]
    num_graphs = len(graph_sizes)
    num_nodes = sum(graph_sizes)

    x = jax.random.normal(k_x, (num_nodes, dim_in), dtype=jnp.float32)
    batch_idx = jnp.concatenate([
        jnp.full((n,), g, dtype=jnp.int32) for g, n in enumerate(graph_sizes)])
    labels = jax.random.randint(k_lbl, (num_graphs,), 0, dim_out, dtype=jnp.int32)

    # MLP(dim_in, dim_out, num_layers=2, bias=True):
    #   layer 1: Linear(dim_in, dim_in) + ReLU;  layer 2: Linear(dim_in, dim_out)
    w1 = jax.random.normal(k_w1, (dim_in, dim_in), jnp.float32) * (1.0 / jnp.sqrt(dim_in))
    b1 = jax.random.normal(k_b1, (dim_in,), jnp.float32) * 0.01
    w2 = jax.random.normal(k_w2, (dim_in, dim_out), jnp.float32) * (1.0 / jnp.sqrt(dim_in))
    b2 = jax.random.normal(k_b2, (dim_out,), jnp.float32) * 0.01
    params = (w1, b1, w2, b2)

    ref = _reference(x, batch_idx, num_graphs, params)

    # (a) multi-tile accumulation with a ragged last node tile (384 nodes, 256-row tiles).
    pred_a, lbl_a = gnn_graph_head(x, batch_idx, num_graphs, params, labels,
                                   node_tile=256, num_splits=1)
    pred_a = jax.block_until_ready(pred_a)
    assert pred_a.shape == (num_graphs, dim_out)
    assert jnp.allclose(pred_a, ref, atol=1e-4, rtol=1e-4), "mismatch (single split)"

    # (b) 2-way "parallel" split of the node stream (v7x 2-TensorCore layout); also
    #     exercises the clamped, fully-masked rounding tile past the end of the nodes.
    pred_b, lbl_b = gnn_graph_head(x, batch_idx, num_graphs, params, labels,
                                   node_tile=128, num_splits=2)
    pred_b = jax.block_until_ready(pred_b)
    assert pred_b.shape == (num_graphs, dim_out)
    assert jnp.allclose(pred_b, ref, atol=1e-4, rtol=1e-4), "mismatch (two splits)"

    assert jnp.array_equal(lbl_a, labels) and jnp.array_equal(lbl_b, labels)
    print("KERNEL_OK")
</pallas_src>

<mosaic_0001>
module attributes {stable_mosaic.version = 11 : i64} {
  func.func @kernel(%arg0: i32, %arg1: i32, %arg2: memref<1x256xi32, #tpu.memory_space<vmem>>, %arg3: memref<256x32xf32, #tpu.memory_space<vmem>>, %arg4: memref<1x8x32xf32, #tpu.memory_space<vmem>>, %arg5: memref<1x8x1xf32, #tpu.memory_space<vmem>>, %arg6: memref<8x32xf32, #tpu.memory_space<vmem>>, %arg7: memref<8x1xf32, #tpu.memory_space<vmem>>) attributes {dimension_semantics = [#tpu.dimension_semantics<parallel>, #tpu.dimension_semantics<arbitrary>], iteration_bounds = array<i64: 1, 2>, scalar_prefetch = 0 : i64, scratch_operands = 2 : i64, tpu.core_type = #tpu.core_type<tc>, window_params = [{transform_indices = @transform_0, window_bounds = array<i64: 1, 256>}, {transform_indices = @transform_1, window_bounds = array<i64: 256, 32>}, {transform_indices = @transform_2, window_bounds = array<i64: 1, 8, 32>}, {transform_indices = @transform_3, window_bounds = array<i64: 1, 8, 1>}]} {
    %c0_i32 = arith.constant 0 : i32
    %0 = arith.cmpi eq, %arg1, %c0_i32 : i32
    %1 = arith.extui %0 : i1 to i32
    %c0_i32_0 = arith.constant 0 : i32
    %2 = arith.cmpi ne, %1, %c0_i32_0 : i32
    scf.if %2 {
      %cst_17 = arith.constant 0.000000e+00 : f32
      %36 = vector.broadcast %cst_17 : f32 to vector<8x32xf32>
      %c0_18 = arith.constant 0 : index
      %c0_19 = arith.constant 0 : index
      %37 = vector.load %arg6[%c0_18, %c0_19] : memref<8x32xf32, #tpu.memory_space<vmem>>, vector<8x32xf32>
      tpu.vector_store %arg6[%c0_18, %c0_19], %36 {strides = array<i32>} : memref<8x32xf32, #tpu.memory_space<vmem>>, vector<8x32xf32>,
      %cst_20 = arith.constant 0.000000e+00 : f32
      %38 = vector.broadcast %cst_20 : f32 to vector<8x1xf32>
      %c0_21 = arith.constant 0 : index
      %c0_22 = arith.constant 0 : index
      %39 = vector.load %arg7[%c0_21, %c0_22] : memref<8x1xf32, #tpu.memory_space<vmem>>, vector<8x1xf32>
      tpu.vector_store %arg7[%c0_21, %c0_22], %38 {strides = array<i32>} : memref<8x1xf32, #tpu.memory_space<vmem>>, vector<8x1xf32>,
    } else {
    }
    %c2_i32 = arith.constant 2 : i32
    %3 = arith.muli %arg0, %c2_i32 : i32
    %4 = arith.addi %3, %arg1 : i32
    %c256_i32 = arith.constant 256 : i32
    %5 = arith.muli %4, %c256_i32 : i32
    %c384_i32 = arith.constant 384 : i32
    %6 = arith.subi %c384_i32, %5 : i32
    %c0 = arith.constant 0 : index
    %c0_1 = arith.constant 0 : index
    %7 = vector.load %arg2[%c0, %c0_1] : memref<1x256xi32, #tpu.memory_space<vmem>>, vector<1x256xi32>
    %8 = tpu.iota {dimensions = array<i32: 0>} : vector<8x256xi32>
    %9 = tpu.iota {dimensions = array<i32: 1>} : vector<8x256xi32>
    %10 = vector.broadcast %7 : vector<1x256xi32> to vector<8x256xi32>
    %11 = arith.cmpi eq, %8, %10 : vector<8x256xi32>
    %12 = vector.broadcast %6 : i32 to vector<8x256xi32>
    %13 = arith.cmpi slt, %9, %12 : vector<8x256xi32>
    %14 = arith.andi %11, %13 : vector<8x256xi1>
    %cst = arith.constant 1.000000e+00 : f32
    %cst_2 = arith.constant 0.000000e+00 : f32
    %15 = vector.broadcast %cst : f32 to vector<8x256xf32>
    %16 = vector.broadcast %cst_2 : f32 to vector<8x256xf32>
    %17 = arith.select %14, %15, %16 : vector<8x256xi1>, vector<8x256xf32>
    %c0_3 = arith.constant 0 : index
    %c0_4 = arith.constant 0 : index
    %18 = vector.load %arg3[%c0_3, %c0_4] : memref<256x32xf32, #tpu.memory_space<vmem>>, vector<256x32xf32>
    %19 = tpu.iota {dimensions = array<i32: 0>} : vector<256x32xi32>
    %20 = vector.broadcast %6 : i32 to vector<256x32xi32>
    %21 = arith.cmpi slt, %19, %20 : vector<256x32xi32>
    %cst_5 = arith.constant 0.000000e+00 : f32
    %22 = vector.broadcast %cst_5 : f32 to vector<256x32xf32>
    %23 = arith.select %21, %18, %22 : vector<256x32xi1>, vector<256x32xf32>
    %c0_6 = arith.constant 0 : index
    %c0_7 = arith.constant 0 : index
    %24 = vector.load %arg6[%c0_6, %c0_7] : memref<8x32xf32, #tpu.memory_space<vmem>>, vector<8x32xf32>
    %cst_8 = arith.constant dense<0.000000e+00> : vector<8x32xf32>
    %25 = tpu.matmul %17, %23, %cst_8 {dimension_numbers = #tpu.dot_dimension_numbers<[1], [0], [0], [1], [0, 0, 1, 1], [], []>, precision = #tpu.contract_precision<fp32>} : vector<8x256xf32>, vector<256x32xf32>, vector<8x32xf32> -> vector<8x32xf32>
    %26 = arith.addf %24, %25 : vector<8x32xf32>
    %c0_9 = arith.constant 0 : index
    %c0_10 = arith.constant 0 : index
    %27 = vector.load %arg6[%c0_9, %c0_10] : memref<8x32xf32, #tpu.memory_space<vmem>>, vector<8x32xf32>
    tpu.vector_store %arg6[%c0_9, %c0_10], %26 {strides = array<i32>} : memref<8x32xf32, #tpu.memory_space<vmem>>, vector<8x32xf32>,
    %c0_11 = arith.constant 0 : index
    %c0_12 = arith.constant 0 : index
    %28 = vector.load %arg7[%c0_11, %c0_12] : memref<8x1xf32, #tpu.memory_space<vmem>>, vector<8x1xf32>
    %cst_13 = arith.constant dense<0.000000e+00> : vector<8xf32>
    %29 = vector.multi_reduction <add>, %17, %cst_13 [1] : vector<8x256xf32> to vector<8xf32>
    %30 = vector.shape_cast %29 : vector<8xf32> to vector<8x1xf32>
    %31 = arith.addf %28, %30 : vector<8x1xf32>
    %c0_14 = arith.constant 0 : index
    %c0_15 = arith.constant 0 : index
    %32 = vector.load %arg7[%c0_14, %c0_15] : memref<8x1xf32, #tpu.memory_space<vmem>>, vector<8x1xf32>
    tpu.vector_store %arg7[%c0_14, %c0_15], %31 {strides = array<i32>} : memref<8x1xf32, #tpu.memory_space<vmem>>, vector<8x1xf32>,
    %c1_i32 = arith.constant 1 : i32
    %33 = arith.cmpi eq, %arg1, %c1_i32 : i32
    %34 = arith.extui %33 : i1 to i32
    %c0_i32_16 = arith.constant 0 : i32
    %35 = arith.cmpi ne, %34, %c0_i32_16 : i32
    scf.if %35 {
      %c0_17 = arith.constant 0 : index
      %c0_18 = arith.constant 0 : index
      %36 = vector.load %arg6[%c0_17, %c0_18] : memref<8x32xf32, #tpu.memory_space<vmem>>, vector<8x32xf32>
      %c0_19 = arith.constant 0 : index
      %c0_20 = arith.constant 0 : index
      %c0_21 = arith.constant 0 : index
      %37 = vector.load %arg4[%c0_19, %c0_20, %c0_21] : memref<1x8x32xf32, #tpu.memory_space<vmem>>, vector<1x8x32xf32>
      %38 = vector.shape_cast %37 : vector<1x8x32xf32> to vector<8x32xf32>
      %39 = vector.shape_cast %36 : vector<8x32xf32> to vector<1x8x32xf32>
      tpu.vector_store %arg4[%c0_19, %c0_20, %c0_21], %39 {strides = array<i32>} : memref<1x8x32xf32, #tpu.memory_space<vmem>>, vector<1x8x32xf32>,
      %c0_22 = arith.constant 0 : index
      %c0_23 = arith.constant 0 : index
      %40 = vector.load %arg7[%c0_22, %c0_23] : memref<8x1xf32, #tpu.memory_space<vmem>>, vector<8x1xf32>
      %c0_24 = arith.constant 0 : index
      %c0_25 = arith.constant 0 : index
      %c0_26 = arith.constant 0 : index
      %41 = vector.load %arg5[%c0_24, %c0_25, %c0_26] : memref<1x8x1xf32, #tpu.memory_space<vmem>>, vector<1x8x1xf32>
      %42 = vector.shape_cast %41 : vector<1x8x1xf32> to vector<8x1xf32>
      %43 = vector.shape_cast %40 : vector<8x1xf32> to vector<1x8x1xf32>
      tpu.vector_store %arg5[%c0_24, %c0_25, %c0_26], %43 {strides = array<i32>} : memref<1x8x1xf32, #tpu.memory_space<vmem>>, vector<1x8x1xf32>,
    } else {
    }
    return
  }
  func.func @transform_0(%arg0: i32, %arg1: i32) -> (i32, i32) {
    %c2_i32 = arith.constant 2 : i32
    %0 = arith.muli %arg0, %c2_i32 : i32
    %1 = arith.addi %0, %arg1 : i32
    %c1_i32 = arith.constant 1 : i32
    %2 = arith.minsi %1, %c1_i32 : i32
    %c0_i32 = arith.constant 0 : i32
    %c0_i32_0 = arith.constant 0 : i32
    return %c0_i32, %2 : i32, i32
  }
  func.func @transform_1(%arg0: i32, %arg1: i32) -> (i32, i32) {
    %c2_i32 = arith.constant 2 : i32
    %0 = arith.muli %arg0, %c2_i32 : i32
    %1 = arith.addi %0, %arg1 : i32
    %c1_i32 = arith.constant 1 : i32
    %2 = arith.minsi %1, %c1_i32 : i32
    %c0_i32 = arith.constant 0 : i32
    %c0_i32_0 = arith.constant 0 : i32
    return %2, %c0_i32 : i32, i32
  }
  func.func @transform_2(%arg0: i32, %arg1: i32) -> (i32, i32, i32) {
    %c0_i32 = arith.constant 0 : i32
    %c0_i32_0 = arith.constant 0 : i32
    %c0_i32_1 = arith.constant 0 : i32
    return %arg0, %c0_i32, %c0_i32_0 : i32, i32, i32
  }
  func.func @transform_3(%arg0: i32, %arg1: i32) -> (i32, i32, i32) {
    %c0_i32 = arith.constant 0 : i32
    %c0_i32_0 = arith.constant 0 : i32
    %c0_i32_1 = arith.constant 0 : i32
    return %arg0, %c0_i32, %c0_i32_0 : i32, i32, i32
  }
}

</mosaic_0001>

<llo_original>
// kernel: tpu_custom_call.1
$region0: #{tpu_custom_call.1}
  #allocation0 [shape = 'u32[]', space=smem, size = 0x4, offset = 0x4, fixed_abs, tag = 'smem constant byte address 0x4 - core index']
  #allocation1 [shape = 'u32[144,128]{1,0:T(1,128)}', space=vmem, size = 0x12000, scoped, tag = 'internal scratch']
  #allocation2 [shape = 'f32[8,32]{1,0:T(8,128)}', space=vmem, size = 0x1000, scoped, tag = 'scratch operand']
  #allocation3 [shape = 'f32[8,1]{1,0:T(8,128)}', space=vmem, size = 0x1000, scoped, tag = 'scratch operand']
  %s0 = inlined_call_operand.vmem [shape: s32[1,384], index: 0, kind: input, shape index: {}]
  %s1 = inlined_call_operand.vmem [shape: f32[384,32], index: 1, kind: input, shape index: {}]
  %s2 = inlined_call_operand.hbm [shape: f32[1,8,32], index: 2, kind: output, shape index: {0}]
  %s3 = inlined_call_operand.vmem [shape: f32[1,8,1], index: 3, kind: output, shape index: {1}]
  %4 = xla_tuple %s2, %s3
  %s5 = sld [smem:[#allocation0]]
  $region57: #{tpu_custom_call.1} parent=0
    _
  %s7 = ssub.s32 1, %s5
  %s8 = scalar_select 0, %s7, %s5
  $region1: #{tpu_custom_call.1} parent=0
    #allocation4 [shape = 'u8[4096]{0}', space=vmem, size = 0x1000, scoped, tag = 'output window, operand 0, single buffered']
    #allocation5 [shape = 's32[2]{0}', space=sflag, size = 0x8, scoped, tag = 'scoped memory for tpu_custom_call.1']
    %9 = vsyncpa [#allocation5], 0
    loop: start=0, step=1, limit=4
    $region2: #{tpu_custom_call.1} parent=1 // loop_pre_header
      _
    $region3: #{tpu_custom_call.1} parent=1 // loop_header
      %s11 = sphi 0, %s15
      %p12 = scmp.ge.s32.totalorder %s11, 4
      %s18 = sphi 0, %s30
      %s19 = sphi 0, %s26
      %s20 = sphi 0, %s18
      %s21 = sphi 0, %s19
      %s22 = sphi 0, %s20
      %s23 = sphi 0, %s21
      %s41 = sphi 0, %s43
      %s44 = sphi 0, %s41
      %s45 = sphi 0, %s44
      %s61 = sphi 0, %s45
      %s75 = sphi 0, %s77
      %s78 = sphi 0, %s75
      %s79 = sphi 0, %s78
      %s95 = sphi 0, %s79
      %s101 = sphi 0, %s103
      %s104 = sphi 0, %s101
      %s105 = sphi 0, %s104
      %s121 = sphi 0, %s105
      %s127 = sphi 0, %s129
      %s130 = sphi 0, %s127
      %s131 = sphi 0, %s130
      %s147 = sphi 0, %s131
    $region4: #{tpu_custom_call.1} parent=1 // loop_header_branch
      %14 = sbr.rel (%p12) target = $region8
    $region5: #{tpu_custom_call.1} parent=1 // loop_body
      %s16 = ssub.s32 %s11, 1
      %s17 = ssub.s32 %s11, 2
      %s24 = sadd.s32 1, %s19
      %p25 = scmp.ge.s32.totalorder %s24, 2
      %s26 = scalar_select %p25, 0, %s24
      %s27 = sadd.s32 1, %s18
      %s28 = scalar_select %p25, %s27, %s18
      %p29 = scmp.ge.s32.totalorder %s28, 1
      %s30 = scalar_select %p29, 0, %s28
      %s31 = smul.u32 %s18, 2
      %s32 = sadd.s32 %s31, %s19
      %p33 = scmp.lt.s32.totalorder %s32, 1
      %s34 = scalar_select %p33, %s32, 1
      %s35 = smul.u32 %s30, 2
      %s36 = sadd.s32 %s35, %s26
      %p37 = scmp.lt.s32.totalorder %s36, 1
      %s38 = scalar_select %p37, %s36, 1
      %s39 = ssub.s32 %s34, %s38
      %p40 = scmp.eq.s32.totalorder %s39, 0
      %s42 = sadd.s32 %s41, 1
      %s43 = scalar_select %p40, %s41, %s42
      %p46 = pneg %p40
      %p47 = scmp.eq.s32.totalorder %s11, 1
      %p48 = por %p46, %p47
      %p49 = scmp.ne.s32.totalorder %s41, %s44
      %p50 = scmp.eq.s32.totalorder %s11, 0
      %p51 = por %p49, %p50
      %p52 = scmp.ne.s32.totalorder %s41, %s44
      %p53 = scmp.eq.s32.totalorder %s16, 1
      %p54 = por %p52, %p53
      %p55 = scmp.ne.s32.totalorder %s44, %s45
      %p56 = scmp.eq.s32.totalorder %s16, 0
      %p57 = por %p55, %p56
      %p58 = scmp.ne.s32.totalorder %s44, %s45
      %p59 = scmp.eq.s32.totalorder %s17, 1
      %p60 = por %p58, %p59
      %p62 = scmp.ne.s32.totalorder %s45, %s61
      %p63 = scmp.eq.s32.totalorder %s17, 0
      %p64 = por %p62, %p63
      %s65 = smul.u32 %s18, 2
      %s66 = sadd.s32 %s65, %s19
      %p67 = scmp.lt.s32.totalorder %s66, 1
      %s68 = scalar_select %p67, %s66, 1
      %s69 = smul.u32 %s30, 2
      %s70 = sadd.s32 %s69, %s26
      %p71 = scmp.lt.s32.totalorder %s70, 1
      %s72 = scalar_select %p71, %s70, 1
      %s73 = ssub.s32 %s68, %s72
      %p74 = scmp.eq.s32.totalorder %s73, 0
      %s76 = sadd.s32 %s75, 1
      %s77 = scalar_select %p74, %s75, %s76
      %p80 = pneg %p74
      %p81 = scmp.eq.s32.totalorder %s11, 1
      %p82 = por %p80, %p81
      %p83 = scmp.ne.s32.totalorder %s75, %s78
      %p84 = scmp.eq.s32.totalorder %s11, 0
      %p85 = por %p83, %p84
      %p86 = scmp.ne.s32.totalorder %s75, %s78
      %p87 = scmp.eq.s32.totalorder %s16, 1
      %p88 = por %p86, %p87
      %p89 = scmp.ne.s32.totalorder %s78, %s79
      %p90 = scmp.eq.s32.totalorder %s16, 0
      %p91 = por %p89, %p90
      %p92 = scmp.ne.s32.totalorder %s78, %s79
      %p93 = scmp.eq.s32.totalorder %s17, 1
      %p94 = por %p92, %p93
      %p96 = scmp.ne.s32.totalorder %s79, %s95
      %p97 = scmp.eq.s32.totalorder %s17, 0
      %p98 = por %p96, %p97
      %s99 = ssub.s32 %s18, %s30
      %p100 = scmp.eq.s32.totalorder %s99, 0
      %s102 = sadd.s32 %s101, 1
      %s103 = scalar_select %p100, %s101, %s102
      %p106 = pneg %p100
      %p107 = scmp.eq.s32.totalorder %s11, 1
      %p108 = por %p106, %p107
      %p109 = scmp.ne.s32.totalorder %s101, %s104
      %p110 = scmp.eq.s32.totalorder %s11, 0
      %p111 = por %p109, %p110
      %p112 = scmp.ne.s32.totalorder %s101, %s104
      %p113 = scmp.eq.s32.totalorder %s16, 1
      %p114 = por %p112, %p113
      %p115 = scmp.ne.s32.totalorder %s104, %s105
      %p116 = scmp.eq.s32.totalorder %s16, 0
      %p117 = por %p115, %p116
      %p118 = scmp.ne.s32.totalorder %s104, %s105
      %p119 = scmp.eq.s32.totalorder %s17, 1
      %p120 = por %p118, %p119
      %p122 = scmp.ne.s32.totalorder %s105, %s121
      %p123 = scmp.eq.s32.totalorder %s17, 0
      %p124 = por %p122, %p123
      %s125 = ssub.s32 %s18, %s30
      %p126 = scmp.eq.s32.totalorder %s125, 0
      %s128 = sadd.s32 %s127, 1
      %s129 = scalar_select %p126, %s127, %s128
      %p132 = pneg %p126
      %p133 = scmp.eq.s32.totalorder %s11, 1
      %p134 = por %p132, %p133
      %p135 = scmp.ne.s32.totalorder %s127, %s130
      %p136 = scmp.eq.s32.totalorder %s11, 0
      %p137 = por %p135, %p136
      %p138 = scmp.ne.s32.totalorder %s127, %s130
      %p139 = scmp.eq.s32.totalorder %s16, 1
      %p140 = por %p138, %p139
      %p141 = scmp.ne.s32.totalorder %s130, %s131
      %p142 = scmp.eq.s32.totalorder %s16, 0
      %p143 = por %p141, %p142
      %p144 = scmp.ne.s32.totalorder %s130, %s131
      %p145 = scmp.eq.s32.totalorder %s17, 1
      %p146 = por %p144, %p145
      %p148 = scmp.ne.s32.totalorder %s131, %s147
      %p149 = scmp.eq.s32.totalorder %s17, 0
      %p150 = por %p148, %p149
      %p151 = scmp.le.s32.totalorder 1, %s11
      %p152 = scmp.lt.s32.totalorder %s11, 3
      %p153 = pnand %p151, %p152
      %p154 = pneg %p153
      // Predicated region
      $region9: #{tpu_custom_call.1} parent=5 // pred_check
        _
      $region10: #{tpu_custom_call.1} parent=5 // pred_check_branch
        %156 = sbr.rel (%p153) target = $region12
      $region11: #{tpu_custom_call.1} parent=5 // pred_region
        %s157 = ssub.s32 %s11, 1
      $region12: #{tpu_custom_call.1} parent=5 // pred_fallthru
        _
      %p158 = scmp.lt.s32.totalorder %s11, 2
      // Predicated region
      $region13: #{tpu_custom_call.1} parent=5 // pred_check
        %p159 = pneg %p158
      $region14: #{tpu_custom_call.1} parent=5 // pred_check_branch
        %161 = sbr.rel (%p159) target = $region16
      $region15: #{tpu_custom_call.1} parent=5 // pred_region
        // Predicated region
        $region17: #{tpu_custom_call.1} parent=15 // pred_check
          %p162 = pneg %p51
        $region18: #{tpu_custom_call.1} parent=15 // pred_check_branch
          %164 = sbr.rel (%p162) target = $region20
        $region19: #{tpu_custom_call.1} parent=15 // pred_region
          %s165 = smul.u32 %s18, 2
          %s166 = sadd.s32 %s165, %s19
          %p167 = scmp.lt.s32.totalorder %s166, 1
          %s168 = scalar_select %p167, %s166, 1
          %s169 = smul.u32 2, %s168
          %s170 = ssub.s32 3, %s169
          %p171 = scmp.lt.s32.totalorder %s170, 2
          %s172 = scalar_select %p171, %s170, 2
          %s173 = smul.u32 16, %s172
          %p174 = scmp.lt.s32.totalorder %s169, 2
          %s175 = scalar_select %p174, %s169, 2
          %s176 = scalar_lea.vmem %s0, %s175
          %s177 = smul.u32 %s18, 2
          %s178 = sadd.s32 %s177, %s19
          %p179 = scmp.lt.s32.totalorder %s178, 1
          %s180 = scalar_select %p179, %s178, 1
          %s181 = smul.u32 2, %s180
          %s182 = ssub.s32 3, %s181
          %p183 = scmp.lt.s32.totalorder %s182, 2
          %s184 = scalar_select %p183, %s182, 2
          %s185 = smul.u32 16, %s184
        $region20: #{tpu_custom_call.1} parent=15 // pred_fallthru
          _
        // Predicated region
        $region21: #{tpu_custom_call.1} parent=15 // pred_check
          %p186 = pneg %p85
        $region22: #{tpu_custom_call.1} parent=15 // pred_check_branch
          %188 = sbr.rel (%p186) target = $region24
        $region23: #{tpu_custom_call.1} parent=15 // pred_region
          %s189 = smul.u32 %s18, 2
          %s190 = sadd.s32 %s189, %s19
          %p191 = scmp.lt.s32.totalorder %s190, 1
          %s192 = scalar_select %p191, %s190, 1
          %s193 = smul.u32 32, %s192
          %s194 = ssub.s32 48, %s193
          %p195 = scmp.lt.s32.totalorder %s194, 32
          %s196 = scalar_select %p195, %s194, 32
          %s197 = smul.u32 128, %s196
          %p198 = scmp.lt.s32.totalorder %s193, 47
          %s199 = scalar_select %p198, %s193, 47
          %s200 = smul.addr %s199, 8
          %s201 = scalar_lea.vmem %s1, %s200
          %s202 = smul.u32 %s18, 2
          %s203 = sadd.s32 %s202, %s19
          %p204 = scmp.lt.s32.totalorder %s203, 1
          %s205 = scalar_select %p204, %s203, 1
          %s206 = smul.u32 32, %s205
          %s207 = ssub.s32 48, %s206
          %p208 = scmp.lt.s32.totalorder %s207, 32
          %s209 = scalar_select %p208, %s207, 32
          %s210 = smul.u32 128, %s209
        $region24: #{tpu_custom_call.1} parent=15 // pred_fallthru
          _
      $region16: #{tpu_custom_call.1} parent=5 // pred_fallthru
        _
      %p211 = scmp.le.s32.totalorder 1, %s11
      %p212 = scmp.lt.s32.totalorder %s11, 3
      %p213 = pnand %p211, %p212
      %p214 = pneg %p213
      // Predicated region
      $region25: #{tpu_custom_call.1} parent=5 // pred_check
        _
      $region26: #{tpu_custom_call.1} parent=5 // pred_check_branch
        %216 = sbr.rel (%p213) target = $region28
      $region27: #{tpu_custom_call.1} parent=5 // pred_region
        %s217 = ssub.s32 %s11, 1
        %s218 = smul.u32 %s20, 2
        %s219 = sadd.s32 %s218, %s21
        %p220 = scmp.lt.s32.totalorder %s219, 1
        %s221 = scalar_select %p220, %s219, 1
        %s222 = smul.u32 2, %s221
        %s223 = ssub.s32 3, %s222
        %p224 = scmp.lt.s32.totalorder %s223, 2
        %s225 = scalar_select %p224, %s223, 2
        %s226 = smul.u32 16, %s225
        %p227 = scmp.lt.s32.totalorder %s222, 2
        %s228 = scalar_select %p227, %s222, 2
        %s229 = scalar_lea.vmem %s0, %s228
        %p230 = pneg %p57
        %p231 = pneg %p54
        %s232 = smul.u32 %s20, 2
        %s233 = sadd.s32 %s232, %s21
        %p234 = scmp.lt.s32.totalorder %s233, 1
        %s235 = scalar_select %p234, %s233, 1
        %s236 = smul.u32 32, %s235
        %s237 = ssub.s32 48, %s236
        %p238 = scmp.lt.s32.totalorder %s237, 32
        %s239 = scalar_select %p238, %s237, 32
        %s240 = smul.u32 128, %s239
        %p241 = scmp.lt.s32.totalorder %s236, 47
        %s242 = scalar_select %p241, %s236, 47
        %s243 = smul.addr %s242, 8
        %s244 = scalar_lea.vmem %s1, %s243
        %p245 = pneg %p91
        %p246 = pneg %p88
        %p247 = pneg %p117
        %p248 = pneg %p114
        %p249 = pneg %p143
        %p250 = pneg %p140
        %p251 = scmp.lt.s32.totalorder %s20, 0
        %s252 = scalar_select %p251, %s20, 0
        %s253 = smul.addr %s252, 8
        %s254 = scalar_lea.vmem %s3, %s253
        %s255 = smul.u32 %s20, 2
        %s256 = sadd.s32 %s255, %s21
        %p257 = scmp.lt.s32.totalorder %s256, 1
        %s258 = scalar_select %p257, %s256, 1
        %s259 = smul.u32 2, %s258
        %s260 = ssub.s32 3, %s259
        %p261 = scmp.lt.s32.totalorder %s260, 2
        %s262 = scalar_select %p261, %s260, 2
        %s263 = smul.u32 16, %s262
        %p264 = scmp.lt.s32.totalorder %s259, 2
        %s265 = scalar_select %p264, %s259, 2
        %s266 = scalar_lea.vmem %s0, %s265
        %s267 = smul.u32 %s20, 2
        %s268 = sadd.s32 %s267, %s21
        %p269 = scmp.lt.s32.totalorder %s268, 1
        %s270 = scalar_select %p269, %s268, 1
        %s271 = smul.u32 2, %s270
        %s272 = ssub.s32 3, %s271
        %p273 = scmp.lt.s32.totalorder %s272, 2
        %s274 = scalar_select %p273, %s272, 2
        %s275 = smul.u32 16, %s274
        %s276 = smul.u32 %s20, 2
        %s277 = sadd.s32 %s276, %s21
        %p278 = scmp.lt.s32.totalorder %s277, 1
        %s279 = scalar_select %p278, %s277, 1
        %s280 = smul.u32 32, %s279
        %s281 = ssub.s32 48, %s280
        %p282 = scmp.lt.s32.totalorder %s281, 32
        %s283 = scalar_select %p282, %s281, 32
        %s284 = smul.u32 128, %s283
        %p285 = scmp.lt.s32.totalorder %s280, 47
        %s286 = scalar_select %p285, %s280, 47
        %s287 = smul.addr %s286, 8
        %s288 = scalar_lea.vmem %s1, %s287
        %s289 = smul.u32 %s20, 2
        %s290 = sadd.s32 %s289, %s21
        %p291 = scmp.lt.s32.totalorder %s290, 1
        %s292 = scalar_select %p291, %s290, 1
        %s293 = smul.u32 32, %s292
        %s294 = ssub.s32 48, %s293
        %p295 = scmp.lt.s32.totalorder %s294, 32
        %s296 = scalar_select %p295, %s294, 32
        %s297 = smul.u32 128, %s296
        %p298 = scmp.lt.s32.totalorder %s20, 0
        %s299 = scalar_select %p298, %s20, 0
        %s300 = smul.addr %s299, 8
        %s301 = scalar_lea.vmem %s3, %s300
        %p302 = scmp.eq.s32.totalorder %s21, 0
        // Predicated region
        $region29: #{tpu_custom_call.1} parent=27 // pred_check
          %p303 = pneg %p302
        $region30: #{tpu_custom_call.1} parent=27 // pred_check_branch
          %305 = sbr.rel (%p303) target = $region32
        $region31: #{tpu_custom_call.1} parent=27 // pred_region
          %vm306 = vcmask 261120
          %307 = vst.msk [vmem:[#allocation2] sm:$0xff] %vm306, 0.0
          %vm308 = vcmask 7168
          %309 = vst.msk [vmem:[#allocation3] sm:$0xff] %vm308, 0.0
        $region32: #{tpu_custom_call.1} parent=27 // pred_fallthru
          _
        %s310 = smul.u32 %s20, 2
        %s311 = sadd.s32 %s310, %s21
        %s312 = smul.u32 %s311, 256
        %s313 = ssub.s32 384, %s312
        %v314 = vld [vmem:[%s266] sm:$0x3]
        %v315 = vlaneseq
        %v316 = vshrl.u32 %v315, 7
        %v317 = vlaneseq
        %v318 = vand.u32 %v317, 127
        %v319 = vadd.s32 %v318, 128
        %v320 = vlaneseq
        %v321 = vshrl.u32 %v320, 7
        %v322 = vsub.s32 0, %v321
        %v323 = vrot.slane %v314, %v322
        %v324 = vlaneseq
        %v325 = vshrl.u32 %v324, 7
        %v326 = vsub.s32 1, %v325
        %v327 = vrot.slane %v314, %v326
        %vm328 = vcmp.eq.s32.totalorder %v316, %v323
        %vm329 = vcmp.eq.s32.totalorder %v316, %v327
        %v330 = vstv %s313
        %vm331 = vcmp.lt.s32.totalorder %v318, %v330
        %vm332 = vcmp.lt.s32.totalorder %v319, %v330
        %vm333 = vmand %vm328, %vm331
        %vm334 = vmand %vm329, %vm332
        %v335 = vsel %vm333, 1.0, 0.0
        %v336 = vsel %vm334, 1.0, 0.0
        %v337 = vld [vmem:[%s288] sm:$0xff]
        %v338 = vld [vmem:[%s288 + $0x8] sm:$0xff]
        %v339 = vld [vmem:[%s288 + $0x10] sm:$0xff]
        %v340 = vld [vmem:[%s288 + $0x18] sm:$0xff]
        %v341 = vld [vmem:[%s288 + $0x20] sm:$0xff]
        %v342 = vld [vmem:[%s288 + $0x28] sm:$0xff]
        %v343 = vld [vmem:[%s288 + $0x30] sm:$0xff]
        %v344 = vld [vmem:[%s288 + $0x38] sm:$0xff]
        %v345 = vld [vmem:[%s288 + $0x40] sm:$0xff]
        %v346 = vld [vmem:[%s288 + $0x48] sm:$0xff]
        %v347 = vld [vmem:[%s288 + $0x50] sm:$0xff]
        %v348 = vld [vmem:[%s288 + $0x58] sm:$0xff]
        %v349 = vld [vmem:[%s288 + $0x60] sm:$0xff]
        %v350 = vld [vmem:[%s288 + $0x68] sm:$0xff]
        %v351 = vld [vmem:[%s288 + $0x70] sm:$0xff]
        %v352 = vld [vmem:[%s288 + $0x78] sm:$0xff]
        %v353 = vld [vmem:[%s288 + $0x80] sm:$0xff]
        %v354 = vld [vmem:[%s288 + $0x88] sm:$0xff]
        %v355 = vld [vmem:[%s288 + $0x90] sm:$0xff]
        %v356 = vld [vmem:[%s288 + $0x98] sm:$0xff]
        %v357 = vld [vmem:[%s288 + $0xa0] sm:$0xff]
        %v358 = vld [vmem:[%s288 + $0xa8] sm:$0xff]
        %v359 = vld [vmem:[%s288 + $0xb0] sm:$0xff]
        %v360 = vld [vmem:[%s288 + $0xb8] sm:$0xff]
        %v361 = vld [vmem:[%s288 + $0xc0] sm:$0xff]
        %v362 = vld [vmem:[%s288 + $0xc8] sm:$0xff]
        %v363 = vld [vmem:[%s288 + $0xd0] sm:$0xff]
        %v364 = vld [vmem:[%s288 + $0xd8] sm:$0xff]
        %v365 = vld [vmem:[%s288 + $0xe0] sm:$0xff]
        %v366 = vld [vmem:[%s288 + $0xe8] sm:$0xff]
        %v367 = vld [vmem:[%s288 + $0xf0] sm:$0xff]
        %v368 = vld [vmem:[%s288 + $0xf8] sm:$0xff]
        %v369 = vadd.s32 %v316, 8
        %v370 = vadd.s32 %v316, 16
        %v371 = vadd.s32 %v316, 24
        %v372 = vadd.s32 %v316, 32
        %v373 = vadd.s32 %v316, 40
        %v374 = vadd.s32 %v316, 48
        %v375 = vadd.s32 %v316, 56
        %v376 = vadd.s32 %v316, 64
        %v377 = vadd.s32 %v316, 72
        %v378 = vadd.s32 %v316, 80
        %v379 = vadd.s32 %v316, 88
        %v380 = vadd.s32 %v316, 96
        %v381 = vadd.s32 %v316, 104
        %v382 = vadd.s32 %v316, 112
        %v383 = vadd.s32 %v316, 120
        %v384 = vadd.s32 %v316, 128
        %v385 = vadd.s32 %v316, 136
        %v386 = vadd.s32 %v316, 144
        %v387 = vadd.s32 %v316, 152
        %v388 = vadd.s32 %v316, 160
        %v389 = vadd.s32 %v316, 168
        %v390 = vadd.s32 %v316, 176
        %v391 = vadd.s32 %v316, 184
        %v392 = vadd.s32 %v316, 192
        %v393 = vadd.s32 %v316, 200
        %v394 = vadd.s32 %v316, 208
        %v395 = vadd.s32 %v316, 216
        %v396 = vadd.s32 %v316, 224
        %v397 = vadd.s32 %v316, 232
        %v398 = vadd.s32 %v316, 240
        %v399 = vadd.s32 %v316, 248
        %vm400 = vcmp.lt.s32.totalorder %v316, %v330
        %vm401 = vcmp.lt.s32.totalorder %v369, %v330
        %vm402 = vcmp.lt.s32.totalorder %v370, %v330
        %vm403 = vcmp.lt.s32.totalorder %v371, %v330
        %vm404 = vcmp.lt.s32.totalorder %v372, %v330
        %vm405 = vcmp.lt.s32.totalorder %v373, %v330
        %vm406 = vcmp.lt.s32.totalorder %v374, %v330
        %vm407 = vcmp.lt.s32.totalorder %v375, %v330
        %vm408 = vcmp.lt.s32.totalorder %v376, %v330
        %vm409 = vcmp.lt.s32.totalorder %v377, %v330
        %vm410 = vcmp.lt.s32.totalorder %v378, %v330
        %vm411 = vcmp.lt.s32.totalorder %v379, %v330
        %vm412 = vcmp.lt.s32.totalorder %v380, %v330
        %vm413 = vcmp.lt.s32.totalorder %v381, %v330
        %vm414 = vcmp.lt.s32.totalorder %v382, %v330
        %vm415 = vcmp.lt.s32.totalorder %v383, %v330
        %vm416 = vcmp.lt.s32.totalorder %v384, %v330
        %vm417 = vcmp.lt.s32.totalorder %v385, %v330
        %vm418 = vcmp.lt.s32.totalorder %v386, %v330
        %vm419 = vcmp.lt.s32.totalorder %v387, %v330
        %vm420 = vcmp.lt.s32.totalorder %v388, %v330
        %vm421 = vcmp.lt.s32.totalorder %v389, %v330
        %vm422 = vcmp.lt.s32.totalorder %v390, %v330
        %vm423 = vcmp.lt.s32.totalorder %v391, %v330
        %vm424 = vcmp.lt.s32.totalorder %v392, %v330
        %vm425 = vcmp.lt.s32.totalorder %v393, %v330
        %vm426 = vcmp.lt.s32.totalorder %v394, %v330
        %vm427 = vcmp.lt.s32.totalorder %v395, %v330
        %vm428 = vcmp.lt.s32.totalorder %v396, %v330
        %vm429 = vcmp.lt.s32.totalorder %v397, %v330
        %vm430 = vcmp.lt.s32.totalorder %v398, %v330
        %vm431 = vcmp.lt.s32.totalorder %v399, %v330
        %v432 = vsel %vm400, %v337, 0.0
        %v433 = vsel %vm401, %v338, 0.0
        %v434 = vsel %vm402, %v339, 0.0
        %v435 = vsel %vm403, %v340, 0.0
        %v436 = vsel %vm404, %v341, 0.0
        %v437 = vsel %vm405, %v342, 0.0
        %v438 = vsel %vm406, %v343, 0.0
        %v439 = vsel %vm407, %v344, 0.0
        %v440 = vsel %vm408, %v345, 0.0
        %v441 = vsel %vm409, %v346, 0.0
        %v442 = vsel %vm410, %v347, 0.0
        %v443 = vsel %vm411, %v348, 0.0
        %v444 = vsel %vm412, %v349, 0.0
        %v445 = vsel %vm413, %v350, 0.0
        %v446 = vsel %vm414, %v351, 0.0
        %v447 = vsel %vm415, %v352, 0.0
        %v448 = vsel %vm416, %v353, 0.0
        %v449 = vsel %vm417, %v354, 0.0
        %v450 = vsel %vm418, %v355, 0.0
        %v451 = vsel %vm419, %v356, 0.0
        %v452 = vsel %vm420, %v357, 0.0
        %v453 = vsel %vm421, %v358, 0.0
        %v454 = vsel %vm422, %v359, 0.0
        %v455 = vsel %vm423, %v360, 0.0
        %v456 = vsel %vm424, %v361, 0.0
        %v457 = vsel %vm425, %v362, 0.0
        %v458 = vsel %vm426, %v363, 0.0
        %v459 = vsel %vm427, %v364, 0.0
        %v460 = vsel %vm428, %v365, 0.0
        %v461 = vsel %vm429, %v366, 0.0
        %v462 = vsel %vm430, %v367, 0.0
        %v463 = vsel %vm431, %v368, 0.0
        %v464 = vld [vmem:[#allocation2] sm:$0xff]
        %465 = vmatprep.subr.mxu0 0.0
        %v466 = vand.u32 %v432, 4294901760
        %467 = vmatpush1.msra.mxu0 %v466
        %468 = vmatprep.subr.mxu0 0.0
        %v469 = vand.u32 %v433, 4294901760
        %470 = vmatpush1.msra.mxu0 %v469
        %471 = vmatprep.subr.mxu0 0.0
        %v472 = vand.u32 %v434, 4294901760
        %473 = vmatpush1.msra.mxu0 %v472
        %474 = vmatprep.subr.mxu0 0.0
        %v475 = vand.u32 %v435, 4294901760
        %476 = vmatpush1.msra.mxu0 %v475
        %477 = vmatprep.subr.mxu0 0.0
        %v478 = vand.u32 %v436, 4294901760
        %479 = vmatpush1.msra.mxu0 %v478
        %480 = vmatprep.subr.mxu0 0.0
        %v481 = vand.u32 %v437, 4294901760
        %482 = vmatpush1.msra.mxu0 %v481
        %483 = vmatprep.subr.mxu0 0.0
        %v484 = vand.u32 %v438, 4294901760
        %485 = vmatpush1.msra.mxu0 %v484
        %486 = vmatprep.subr.mxu0 0.0
        %v487 = vand.u32 %v439, 4294901760
        %488 = vmatpush1.msra.mxu0 %v487
        %489 = vmatprep.subr.mxu0 0.0
        %v490 = vand.u32 %v440, 4294901760
        %491 = vmatpush1.msra.mxu0 %v490
        %492 = vmatprep.subr.mxu0 0.0
        %v493 = vand.u32 %v441, 4294901760
        %494 = vmatpush1.msra.mxu0 %v493
        %495 = vmatprep.subr.mxu0 0.0
        %v496 = vand.u32 %v442, 4294901760
        %497 = vmatpush1.msra.mxu0 %v496
        %498 = vmatprep.subr.mxu0 0.0
        %v499 = vand.u32 %v443, 4294901760
        %500 = vmatpush1.msra.mxu0 %v499
        %501 = vmatprep.subr.mxu0 0.0
        %v502 = vand.u32 %v444, 4294901760
        %503 = vmatpush1.msra.mxu0 %v502
        %504 = vmatprep.subr.mxu0 0.0
        %v505 = vand.u32 %v445, 4294901760
        %506 = vmatpush1.msra.mxu0 %v505
        %507 = vmatprep.subr.mxu0 0.0
        %v508 = vand.u32 %v446, 4294901760
        %509 = vmatpush1.msra.mxu0 %v508
        %510 = vmatprep.subr.mxu0 0.0
        %v511 = vand.u32 %v447, 4294901760
        %512 = vmatpush1.msra.mxu0 %v511
        %513 = vmatprep.subr.mxu0 0.0
        %v514 = vand.u32 %v448, 4294901760
        %515 = vmatpush1.msra.mxu0 %v514
        %516 = vmatprep.subr.mxu0 0.0
        %v517 = vand.u32 %v449, 4294901760
        %518 = vmatpush1.msra.mxu0 %v517
        %519 = vmatprep.subr.mxu0 0.0
        %v520 = vand.u32 %v450, 4294901760
        %521 = vmatpush1.msra.mxu0 %v520
        %522 = vmatprep.subr.mxu0 0.0
        %v523 = vand.u32 %v451, 4294901760
        %524 = vmatpush1.msra.mxu0 %v523
        %525 = vmatprep.subr.mxu0 0.0
        %v526 = vand.u32 %v452, 4294901760
        %527 = vmatpush1.msra.mxu0 %v526
        %528 = vmatprep.subr.mxu0 0.0
        %v529 = vand.u32 %v453, 4294901760
        %530 = vmatpush1.msra.mxu0 %v529
        %531 = vmatprep.subr.mxu0 0.0
        %v532 = vand.u32 %v454, 4294901760
        %533 = vmatpush1.msra.mxu0 %v532
        %534 = vmatprep.subr.mxu0 0.0
        %v535 = vand.u32 %v455, 4294901760
        %536 = vmatpush1.msra.mxu0 %v535
        %537 = vmatprep.subr.mxu0 0.0
        %v538 = vand.u32 %v456, 4294901760
        %539 = vmatpush1.msra.mxu0 %v538
        %540 = vmatprep.subr.mxu0 0.0
        %v541 = vand.u32 %v457, 4294901760
        %542 = vmatpush1.msra.mxu0 %v541
        %543 = vmatprep.subr.mxu0 0.0
        %v544 = vand.u32 %v458, 4294901760
        %545 = vmatpush1.msra.mxu0 %v544
        %546 = vmatprep.subr.mxu0 0.0
        %v547 = vand.u32 %v459, 4294901760
        %548 = vmatpush1.msra.mxu0 %v547
        %549 = vmatprep.subr.mxu0 0.0
        %v550 = vand.u32 %v460, 4294901760
        %551 = vmatpush1.msra.mxu0 %v550
        %552 = vmatprep.subr.mxu0 0.0
        %v553 = vand.u32 %v461, 4294901760
        %554 = vmatpush1.msra.mxu0 %v553
        %555 = vmatprep.subr.mxu0 0.0
        %v556 = vand.u32 %v462, 4294901760
        %557 = vmatpush1.msra.mxu0 %v556
        %558 = vmatprep.subr.mxu0 0.0
        %v559 = vand.u32 %v463, 4294901760
        %560 = vmatpush1.msra.mxu0 %v559
        %v561 = vsub.f32 %v336, %v336
        %v562 = vand.u32 %v561, 4294901760
        %v563 = vsub.f32 %v561, %v562
        %v564 = vand.u32 %v563, 4294901760
        %565 = vmatprep.mubr.f32.mxu0 %v564
        %v566 = vsub.f32 %v335, %v335
        %v567 = vand.u32 %v566, 4294901760
        %v568 = vsub.f32 %v566, %v567
        %v569 = vand.u32 %v568, 4294901760
        %570 = vmatmul.mubr.f32.gmra.mrb[0].mxu0 %v569
        %v571 = vpop.f32.mrb[0].mxu0
        %v572 = vadd.f32 0.0, %v571
        %v573 = vpop.f32.mrb[0].mxu0
        %574 = vdwg.mxu0
        %575 = vmatprep.subr.mxu0 0.0
        %v576 = vand.u32 %v432, 4294901760
        %v577 = vsub.f32 %v432, %v576
        %v578 = vand.u32 %v577, 4294901760
        %v579 = vsub.f32 %v577, %v578
        %v580 = vand.u32 %v579, 4294901760
        %581 = vmatpush1.msra.mxu0 %v580
        %582 = vmatprep.subr.mxu0 0.0
        %v583 = vand.u32 %v433, 4294901760
        %v584 = vsub.f32 %v433, %v583
        %v585 = vand.u32 %v584, 4294901760
        %v586 = vsub.f32 %v584, %v585
        %v587 = vand.u32 %v586, 4294901760
        %588 = vmatpush1.msra.mxu0 %v587
        %589 = vmatprep.subr.mxu0 0.0
        %v590 = vand.u32 %v434, 4294901760
        %v591 = vsub.f32 %v434, %v590
        %v592 = vand.u32 %v591, 4294901760
        %v593 = vsub.f32 %v591, %v592
        %v594 = vand.u32 %v593, 4294901760
        %595 = vmatpush1.msra.mxu0 %v594
        %596 = vmatprep.subr.mxu0 0.0
        %v597 = vand.u32 %v435, 4294901760
        %v598 = vsub.f32 %v435, %v597
        %v599 = vand.u32 %v598, 4294901760
        %v600 = vsub.f32 %v598, %v599
        %v601 = vand.u32 %v600, 4294901760
        %602 = vmatpush1.msra.mxu0 %v601
        %603 = vmatprep.subr.mxu0 0.0
        %v604 = vand.u32 %v436, 4294901760
        %v605 = vsub.f32 %v436, %v604
        %v606 = vand.u32 %v605, 4294901760
        %v607 = vsub.f32 %v605, %v606
        %v608 = vand.u32 %v607, 4294901760
        %609 = vmatpush1.msra.mxu0 %v608
        %610 = vmatprep.subr.mxu0 0.0
        %v611 = vand.u32 %v437, 4294901760
        %v612 = vsub.f32 %v437, %v611
        %v613 = vand.u32 %v612, 4294901760
        %v614 = vsub.f32 %v612, %v613
        %v615 = vand.u32 %v614, 4294901760
        %616 = vmatpush1.msra.mxu0 %v615
        %617 = vmatprep.subr.mxu0 0.0
        %v618 = vand.u32 %v438, 4294901760
        %v619 = vsub.f32 %v438, %v618
        %v620 = vand.u32 %v619, 4294901760
        %v621 = vsub.f32 %v619, %v620
        %v622 = vand.u32 %v621, 4294901760
        %623 = vmatpush1.msra.mxu0 %v622
        %624 = vmatprep.subr.mxu0 0.0
        %v625 = vand.u32 %v439, 4294901760
        %v626 = vsub.f32 %v439, %v625
        %v627 = vand.u32 %v626, 4294901760
        %v628 = vsub.f32 %v626, %v627
        %v629 = vand.u32 %v628, 4294901760
        %630 = vmatpush1.msra.mxu0 %v629
        %631 = vmatprep.subr.mxu0 0.0
        %v632 = vand.u32 %v440, 4294901760
        %v633 = vsub.f32 %v440, %v632
        %v634 = vand.u32 %v633, 4294901760
        %v635 = vsub.f32 %v633, %v634
        %v636 = vand.u32 %v635, 4294901760
        %637 = vmatpush1.msra.mxu0 %v636
        %638 = vmatprep.subr.mxu0 0.0
        %v639 = vand.u32 %v441, 4294901760
        %v640 = vsub.f32 %v441, %v639
        %v641 = vand.u32 %v640, 4294901760
        %v642 = vsub.f32 %v640, %v641
        %v643 = vand.u32 %v642, 4294901760
        %644 = vmatpush1.msra.mxu0 %v643
        %645 = vmatprep.subr.mxu0 0.0
        %v646 = vand.u32 %v442, 4294901760
        %v647 = vsub.f32 %v442, %v646
        %v648 = vand.u32 %v647, 4294901760
        %v649 = vsub.f32 %v647, %v648
        %v650 = vand.u32 %v649, 4294901760
        %651 = vmatpush1.msra.mxu0 %v650
        %652 = vmatprep.subr.mxu0 0.0
        %v653 = vand.u32 %v443, 4294901760
        %v654 = vsub.f32 %v443, %v653
        %v655 = vand.u32 %v654, 4294901760
        %v656 = vsub.f32 %v654, %v655
        %v657 = vand.u32 %v656, 4294901760
        %658 = vmatpush1.msra.mxu0 %v657
        %659 = vmatprep.subr.mxu0 0.0
        %v660 = vand.u32 %v444, 4294901760
        %v661 = vsub.f32 %v444, %v660
        %v662 = vand.u32 %v661, 4294901760
        %v663 = vsub.f32 %v661, %v662
        %v664 = vand.u32 %v663, 4294901760
        %665 = vmatpush1.msra.mxu0 %v664
        %666 = vmatprep.subr.mxu0 0.0
        %v667 = vand.u32 %v445, 4294901760
        %v668 = vsub.f32 %v445, %v667
        %v669 = vand.u32 %v668, 4294901760
        %v670 = vsub.f32 %v668, %v669
        %v671 = vand.u32 %v670, 4294901760
        %672 = vmatpush1.msra.mxu0 %v671
        %673 = vmatprep.subr.mxu0 0.0
        %v674 = vand.u32 %v446, 4294901760
        %v675 = vsub.f32 %v446, %v674
        %v676 = vand.u32 %v675, 4294901760
        %v677 = vsub.f32 %v675, %v676
        %v678 = vand.u32 %v677, 4294901760
        %679 = vmatpush1.msra.mxu0 %v678
        %680 = vmatprep.subr.mxu0 0.0
        %v681 = vand.u32 %v447, 4294901760
        %v682 = vsub.f32 %v447, %v681
        %v683 = vand.u32 %v682, 4294901760
        %v684 = vsub.f32 %v682, %v683
        %v685 = vand.u32 %v684, 4294901760
        %686 = vmatpush1.msra.mxu0 %v685
        %687 = vmatprep.subr.mxu0 0.0
        %v688 = vand.u32 %v448, 4294901760
        %v689 = vsub.f32 %v448, %v688
        %v690 = vand.u32 %v689, 4294901760
        %v691 = vsub.f32 %v689, %v690
        %v692 = vand.u32 %v691, 4294901760
        %693 = vmatpush1.msra.mxu0 %v692
        %694 = vmatprep.subr.mxu0 0.0
        %v695 = vand.u32 %v449, 4294901760
        %v696 = vsub.f32 %v449, %v695
        %v697 = vand.u32 %v696, 4294901760
        %v698 = vsub.f32 %v696, %v697
        %v699 = vand.u32 %v698, 4294901760
        %700 = vmatpush1.msra.mxu0 %v699
        %701 = vmatprep.subr.mxu0 0.0
        %v702 = vand.u32 %v450, 4294901760
        %v703 = vsub.f32 %v450, %v702
        %v704 = vand.u32 %v703, 4294901760
        %v705 = vsub.f32 %v703, %v704
        %v706 = vand.u32 %v705, 4294901760
        %707 = vmatpush1.msra.mxu0 %v706
        %708 = vmatprep.subr.mxu0 0.0
        %v709 = vand.u32 %v451, 4294901760
        %v710 = vsub.f32 %v451, %v709
        %v711 = vand.u32 %v710, 4294901760
        %v712 = vsub.f32 %v710, %v711
        %v713 = vand.u32 %v712, 4294901760
        %714 = vmatpush1.msra.mxu0 %v713
        %715 = vmatprep.subr.mxu0 0.0
        %v716 = vand.u32 %v452, 4294901760
        %v717 = vsub.f32 %v452, %v716
        %v718 = vand.u32 %v717, 4294901760
        %v719 = vsub.f32 %v717, %v718
        %v720 = vand.u32 %v719, 4294901760
        %721 = vmatpush1.msra.mxu0 %v720
        %722 = vmatprep.subr.mxu0 0.0
        %v723 = vand.u32 %v453, 4294901760
        %v724 = vsub.f32 %v453, %v723
        %v725 = vand.u32 %v724, 4294901760
        %v726 = vsub.f32 %v724, %v725
        %v727 = vand.u32 %v726, 4294901760
        %728 = vmatpush1.msra.mxu0 %v727
        %729 = vmatprep.subr.mxu0 0.0
        %v730 = vand.u32 %v454, 4294901760
        %v731 = vsub.f32 %v454, %v730
        %v732 = vand.u32 %v731, 4294901760
        %v733 = vsub.f32 %v731, %v732
        %v734 = vand.u32 %v733, 4294901760
        %735 = vmatpush1.msra.mxu0 %v734
        %736 = vmatprep.subr.mxu0 0.0
        %v737 = vand.u32 %v455, 4294901760
        %v738 = vsub.f32 %v455, %v737
        %v739 = vand.u32 %v738, 4294901760
        %v740 = vsub.f32 %v738, %v739
        %v741 = vand.u32 %v740, 4294901760
        %742 = vmatpush1.msra.mxu0 %v741
        %743 = vmatprep.subr.mxu0 0.0
        %v744 = vand.u32 %v456, 4294901760
        %v745 = vsub.f32 %v456, %v744
        %v746 = vand.u32 %v745, 4294901760
        %v747 = vsub.f32 %v745, %v746
        %v748 = vand.u32 %v747, 4294901760
        %749 = vmatpush1.msra.mxu0 %v748
        %750 = vmatprep.subr.mxu0 0.0
        %v751 = vand.u32 %v457, 4294901760
        %v752 = vsub.f32 %v457, %v751
        %v753 = vand.u32 %v752, 4294901760
        %v754 = vsub.f32 %v752, %v753
        %v755 = vand.u32 %v754, 4294901760
        %756 = vmatpush1.msra.mxu0 %v755
        %757 = vmatprep.subr.mxu0 0.0
        %v758 = vand.u32 %v458, 4294901760
        %v759 = vsub.f32 %v458, %v758
        %v760 = vand.u32 %v759, 4294901760
        %v761 = vsub.f32 %v759, %v760
        %v762 = vand.u32 %v761, 4294901760
        %763 = vmatpush1.msra.mxu0 %v762
        %764 = vmatprep.subr.mxu0 0.0
        %v765 = vand.u32 %v459, 4294901760
        %v766 = vsub.f32 %v459, %v765
        %v767 = vand.u32 %v766, 4294901760
        %v768 = vsub.f32 %v766, %v767
        %v769 = vand.u32 %v768, 4294901760
        %770 = vmatpush1.msra.mxu0 %v769
        %771 = vmatprep.subr.mxu0 0.0
        %v772 = vand.u32 %v460, 4294901760
        %v773 = vsub.f32 %v460, %v772
        %v774 = vand.u32 %v773, 4294901760
        %v775 = vsub.f32 %v773, %v774
        %v776 = vand.u32 %v775, 4294901760
        %777 = vmatpush1.msra.mxu0 %v776
        %778 = vmatprep.subr.mxu0 0.0
        %v779 = vand.u32 %v461, 4294901760
        %v780 = vsub.f32 %v461, %v779
        %v781 = vand.u32 %v780, 4294901760
        %v782 = vsub.f32 %v780, %v781
        %v783 = vand.u32 %v782, 4294901760
        %784 = vmatpush1.msra.mxu0 %v783
        %785 = vmatprep.subr.mxu0 0.0
        %v786 = vand.u32 %v462, 4294901760
        %v787 = vsub.f32 %v462, %v786
        %v788 = vand.u32 %v787, 4294901760
        %v789 = vsub.f32 %v787, %v788
        %v790 = vand.u32 %v789, 4294901760
        %791 = vmatpush1.msra.mxu0 %v790
        %792 = vmatprep.subr.mxu0 0.0
        %v793 = vand.u32 %v463, 4294901760
        %v794 = vsub.f32 %v463, %v793
        %v795 = vand.u32 %v794, 4294901760
        %v796 = vsub.f32 %v794, %v795
        %v797 = vand.u32 %v796, 4294901760
        %798 = vmatpush1.msra.mxu0 %v797
        %799 = vmatprep.mubr.f32.mxu0 %v336
        %800 = vmatmul.mubr.f32.gmra.mrb[0].mxu0 %v335
        %v801 = vpop.f32.mrb[0].mxu0
        %v802 = vadd.f32 %v572, %v801
        %v803 = vpop.f32.mrb[0].mxu0
        %804 = vdwg.mxu0
        %805 = vmatprep.subr.mxu0 0.0
        %v806 = vand.u32 %v432, 4294901760
        %v807 = vsub.f32 %v432, %v806
        %808 = vmatpush1.msra.mxu0 %v807
        %809 = vmatprep.subr.mxu0 0.0
        %v810 = vand.u32 %v433, 4294901760
        %v811 = vsub.f32 %v433, %v810
        %812 = vmatpush1.msra.mxu0 %v811
        %813 = vmatprep.subr.mxu0 0.0
        %v814 = vand.u32 %v434, 4294901760
        %v815 = vsub.f32 %v434, %v814
        %816 = vmatpush1.msra.mxu0 %v815
        %817 = vmatprep.subr.mxu0 0.0
        %v818 = vand.u32 %v435, 4294901760
        %v819 = vsub.f32 %v435, %v818
        %820 = vmatpush1.msra.mxu0 %v819
        %821 = vmatprep.subr.mxu0 0.0
        %v822 = vand.u32 %v436, 4294901760
        %v823 = vsub.f32 %v436, %v822
        %824 = vmatpush1.msra.mxu0 %v823
        %825 = vmatprep.subr.mxu0 0.0
        %v826 = vand.u32 %v437, 4294901760
        %v827 = vsub.f32 %v437, %v826
        %828 = vmatpush1.msra.mxu0 %v827
        %829 = vmatprep.subr.mxu0 0.0
        %v830 = vand.u32 %v438, 4294901760
        %v831 = vsub.f32 %v438, %v830
        %832 = vmatpush1.msra.mxu0 %v831
        %833 = vmatprep.subr.mxu0 0.0
        %v834 = vand.u32 %v439, 4294901760
        %v835 = vsub.f32 %v439, %v834
        %836 = vmatpush1.msra.mxu0 %v835
        %837 = vmatprep.subr.mxu0 0.0
        %v838 = vand.u32 %v440, 4294901760
        %v839 = vsub.f32 %v440, %v838
        %840 = vmatpush1.msra.mxu0 %v839
        %841 = vmatprep.subr.mxu0 0.0
        %v842 = vand.u32 %v441, 4294901760
        %v843 = vsub.f32 %v441, %v842
        %844 = vmatpush1.msra.mxu0 %v843
        %845 = vmatprep.subr.mxu0 0.0
        %v846 = vand.u32 %v442, 4294901760
        %v847 = vsub.f32 %v442, %v846
        %848 = vmatpush1.msra.mxu0 %v847
        %849 = vmatprep.subr.mxu0 0.0
        %v850 = vand.u32 %v443, 4294901760
        %v851 = vsub.f32 %v443, %v850
        %852 = vmatpush1.msra.mxu0 %v851
        %853 = vmatprep.subr.mxu0 0.0
        %v854 = vand.u32 %v444, 4294901760
        %v855 = vsub.f32 %v444, %v854
        %856 = vmatpush1.msra.mxu0 %v855
        %857 = vmatprep.subr.mxu0 0.0
        %v858 = vand.u32 %v445, 4294901760
        %v859 = vsub.f32 %v445, %v858
        %860 = vmatpush1.msra.mxu0 %v859
        %861 = vmatprep.subr.mxu0 0.0
        %v862 = vand.u32 %v446, 4294901760
        %v863 = vsub.f32 %v446, %v862
        %864 = vmatpush1.msra.mxu0 %v863
        %865 = vmatprep.subr.mxu0 0.0
        %v866 = vand.u32 %v447, 4294901760
        %v867 = vsub.f32 %v447, %v866
        %868 = vmatpush1.msra.mxu0 %v867
        %869 = vmatprep.subr.mxu0 0.0
        %v870 = vand.u32 %v448, 4294901760
        %v871 = vsub.f32 %v448, %v870
        %872 = vmatpush1.msra.mxu0 %v871
        %873 = vmatprep.subr.mxu0 0.0
        %v874 = vand.u32 %v449, 4294901760
        %v875 = vsub.f32 %v449, %v874
        %876 = vmatpush1.msra.mxu0 %v875
        %877 = vmatprep.subr.mxu0 0.0
        %v878 = vand.u32 %v450, 4294901760
        %v879 = vsub.f32 %v450, %v878
        %880 = vmatpush1.msra.mxu0 %v879
        %881 = vmatprep.subr.mxu0 0.0
        %v882 = vand.u32 %v451, 4294901760
        %v883 = vsub.f32 %v451, %v882
        %884 = vmatpush1.msra.mxu0 %v883
        %885 = vmatprep.subr.mxu0 0.0
        %v886 = vand.u32 %v452, 4294901760
        %v887 = vsub.f32 %v452, %v886
        %888 = vmatpush1.msra.mxu0 %v887
        %889 = vmatprep.subr.mxu0 0.0
        %v890 = vand.u32 %v453, 4294901760
        %v891 = vsub.f32 %v453, %v890
        %892 = vmatpush1.msra.mxu0 %v891
        %893 = vmatprep.subr.mxu0 0.0
        %v894 = vand.u32 %v454, 4294901760
        %v895 = vsub.f32 %v454, %v894
        %896 = vmatpush1.msra.mxu0 %v895
        %897 = vmatprep.subr.mxu0 0.0
        %v898 = vand.u32 %v455, 4294901760
        %v899 = vsub.f32 %v455, %v898
        %900 = vmatpush1.msra.mxu0 %v899
        %901 = vmatprep.subr.mxu0 0.0
        %v902 = vand.u32 %v456, 4294901760
        %v903 = vsub.f32 %v456, %v902
        %904 = vmatpush1.msra.mxu0 %v903
        %905 = vmatprep.subr.mxu0 0.0
        %v906 = vand.u32 %v457, 4294901760
        %v907 = vsub.f32 %v457, %v906
        %908 = vmatpush1.msra.mxu0 %v907
        %909 = vmatprep.subr.mxu0 0.0
        %v910 = vand.u32 %v458, 4294901760
        %v911 = vsub.f32 %v458, %v910
        %912 = vmatpush1.msra.mxu0 %v911
        %913 = vmatprep.subr.mxu0 0.0
        %v914 = vand.u32 %v459, 4294901760
        %v915 = vsub.f32 %v459, %v914
        %916 = vmatpush1.msra.mxu0 %v915
        %917 = vmatprep.subr.mxu0 0.0
        %v918 = vand.u32 %v460, 4294901760
        %v919 = vsub.f32 %v460, %v918
        %920 = vmatpush1.msra.mxu0 %v919
        %921 = vmatprep.subr.mxu0 0.0
        %v922 = vand.u32 %v461, 4294901760
        %v923 = vsub.f32 %v461, %v922
        %924 = vmatpush1.msra.mxu0 %v923
        %925 = vmatprep.subr.mxu0 0.0
        %v926 = vand.u32 %v462, 4294901760
        %v927 = vsub.f32 %v462, %v926
        %928 = vmatpush1.msra.mxu0 %v927
        %929 = vmatprep.subr.mxu0 0.0
        %v930 = vand.u32 %v463, 4294901760
        %v931 = vsub.f32 %v463, %v930
        %932 = vmatpush1.msra.mxu0 %v931
        %v933 = vsub.f32 %v336, %v336
        %934 = vmatprep.mubr.f32.mxu0 %v933
        %v935 = vsub.f32 %v335, %v335
        %936 = vmatmul.mubr.f32.gmra.mrb[0].mxu0 %v935
        %v937 = vpop.f32.mrb[0].mxu0
        %v938 = vadd.f32 %v802, %v937
        %v939 = vpop.f32.mrb[0].mxu0
        %940 = vdwg.mxu0
        %941 = vmatprep.subr.mxu0 0.0
        %v942 = vand.u32 %v432, 4294901760
        %943 = vmatpush1.msra.mxu0 %v942
        %944 = vmatprep.subr.mxu0 0.0
        %v945 = vand.u32 %v433, 4294901760
        %946 = vmatpush1.msra.mxu0 %v945
        %947 = vmatprep.subr.mxu0 0.0
        %v948 = vand.u32 %v434, 4294901760
        %949 = vmatpush1.msra.mxu0 %v948
        %950 = vmatprep.subr.mxu0 0.0
        %v951 = vand.u32 %v435, 4294901760
        %952 = vmatpush1.msra.mxu0 %v951
        %953 = vmatprep.subr.mxu0 0.0
        %v954 = vand.u32 %v436, 4294901760
        %955 = vmatpush1.msra.mxu0 %v954
        %956 = vmatprep.subr.mxu0 0.0
        %v957 = vand.u32 %v437, 4294901760
        %958 = vmatpush1.msra.mxu0 %v957
        %959 = vmatprep.subr.mxu0 0.0
        %v960 = vand.u32 %v438, 4294901760
        %961 = vmatpush1.msra.mxu0 %v960
        %962 = vmatprep.subr.mxu0 0.0
        %v963 = vand.u32 %v439, 4294901760
        %964 = vmatpush1.msra.mxu0 %v963
        %965 = vmatprep.subr.mxu0 0.0
        %v966 = vand.u32 %v440, 4294901760
        %967 = vmatpush1.msra.mxu0 %v966
        %968 = vmatprep.subr.mxu0 0.0
        %v969 = vand.u32 %v441, 4294901760
        %970 = vmatpush1.msra.mxu0 %v969
        %971 = vmatprep.subr.mxu0 0.0
        %v972 = vand.u32 %v442, 4294901760
        %973 = vmatpush1.msra.mxu0 %v972
        %974 = vmatprep.subr.mxu0 0.0
        %v975 = vand.u32 %v443, 4294901760
        %976 = vmatpush1.msra.mxu0 %v975
        %977 = vmatprep.subr.mxu0 0.0
        %v978 = vand.u32 %v444, 4294901760
        %979 = vmatpush1.msra.mxu0 %v978
        %980 = vmatprep.subr.mxu0 0.0
        %v981 = vand.u32 %v445, 4294901760
        %982 = vmatpush1.msra.mxu0 %v981
        %983 = vmatprep.subr.mxu0 0.0
        %v984 = vand.u32 %v446, 4294901760
        %985 = vmatpush1.msra.mxu0 %v984
        %986 = vmatprep.subr.mxu0 0.0
        %v987 = vand.u32 %v447, 4294901760
        %988 = vmatpush1.msra.mxu0 %v987
        %989 = vmatprep.subr.mxu0 0.0
        %v990 = vand.u32 %v448, 4294901760
        %991 = vmatpush1.msra.mxu0 %v990
        %992 = vmatprep.subr.mxu0 0.0
        %v993 = vand.u32 %v449, 4294901760
        %994 = vmatpush1.msra.mxu0 %v993
        %995 = vmatprep.subr.mxu0 0.0
        %v996 = vand.u32 %v450, 4294901760
        %997 = vmatpush1.msra.mxu0 %v996
        %998 = vmatprep.subr.mxu0 0.0
        %v999 = vand.u32 %v451, 4294901760
        %1000 = vmatpush1.msra.mxu0 %v999
        %1001 = vmatprep.subr.mxu0 0.0
        %v1002 = vand.u32 %v452, 4294901760
        %1003 = vmatpush1.msra.mxu0 %v1002
        %1004 = vmatprep.subr.mxu0 0.0
        %v1005 = vand.u32 %v453, 4294901760
        %1006 = vmatpush1.msra.mxu0 %v1005
        %1007 = vmatprep.subr.mxu0 0.0
        %v1008 = vand.u32 %v454, 4294901760
        %1009 = vmatpush1.msra.mxu0 %v1008
        %1010 = vmatprep.subr.mxu0 0.0
        %v1011 = vand.u32 %v455, 4294901760
        %1012 = vmatpush1.msra.mxu0 %v1011
        %1013 = vmatprep.subr.mxu0 0.0
        %v1014 = vand.u32 %v456, 4294901760
        %1015 = vmatpush1.msra.mxu0 %v1014
        %1016 = vmatprep.subr.mxu0 0.0
        %v1017 = vand.u32 %v457, 4294901760
        %1018 = vmatpush1.msra.mxu0 %v1017
        %1019 = vmatprep.subr.mxu0 0.0
        %v1020 = vand.u32 %v458, 4294901760
        %1021 = vmatpush1.msra.mxu0 %v1020
        %1022 = vmatprep.subr.mxu0 0.0
        %v1023 = vand.u32 %v459, 4294901760
        %1024 = vmatpush1.msra.mxu0 %v1023
        %1025 = vmatprep.subr.mxu0 0.0
        %v1026 = vand.u32 %v460, 4294901760
        %1027 = vmatpush1.msra.mxu0 %v1026
        %1028 = vmatprep.subr.mxu0 0.0
        %v1029 = vand.u32 %v461, 4294901760
        %1030 = vmatpush1.msra.mxu0 %v1029
        %1031 = vmatprep.subr.mxu0 0.0
        %v1032 = vand.u32 %v462, 4294901760
        %1033 = vmatpush1.msra.mxu0 %v1032
        %1034 = vmatprep.subr.mxu0 0.0
        %v1035 = vand.u32 %v463, 4294901760
        %1036 = vmatpush1.msra.mxu0 %v1035
        %v1037 = vsub.f32 %v336, %v336
        %v1038 = vand.u32 %v1037, 4294901760
        %1039 = vmatprep.mubr.f32.mxu0 %v1038
        %v1040 = vsub.f32 %v335, %v335
        %v1041 = vand.u32 %v1040, 4294901760
        %1042 = vmatmul.mubr.f32.gmra.mrb[0].mxu0 %v1041
        %v1043 = vpop.f32.mrb[0].mxu0
        %v1044 = vadd.f32 %v938, %v1043
        %v1045 = vpop.f32.mrb[0].mxu0
        %1046 = vdwg.mxu0
        %1047 = vmatprep.subr.mxu0 0.0
        %v1048 = vand.u32 %v432, 4294901760
        %v1049 = vsub.f32 %v432, %v1048
        %v1050 = vand.u32 %v1049, 4294901760
        %1051 = vmatpush1.msra.mxu0 %v1050
        %1052 = vmatprep.subr.mxu0 0.0
        %v1053 = vand.u32 %v433, 4294901760
        %v1054 = vsub.f32 %v433, %v1053
        %v1055 = vand.u32 %v1054, 4294901760
        %1056 = vmatpush1.msra.mxu0 %v1055
        %1057 = vmatprep.subr.mxu0 0.0
        %v1058 = vand.u32 %v434, 4294901760
        %v1059 = vsub.f32 %v434, %v1058
        %v1060 = vand.u32 %v1059, 4294901760
        %1061 = vmatpush1.msra.mxu0 %v1060
        %1062 = vmatprep.subr.mxu0 0.0
        %v1063 = vand.u32 %v435, 4294901760
        %v1064 = vsub.f32 %v435, %v1063
        %v1065 = vand.u32 %v1064, 4294901760
        %1066 = vmatpush1.msra.mxu0 %v1065
        %1067 = vmatprep.subr.mxu0 0.0
        %v1068 = vand.u32 %v436, 4294901760
        %v1069 = vsub.f32 %v436, %v1068
        %v1070 = vand.u32 %v1069, 4294901760
        %1071 = vmatpush1.msra.mxu0 %v1070
        %1072 = vmatprep.subr.mxu0 0.0
        %v1073 = vand.u32 %v437, 4294901760
        %v1074 = vsub.f32 %v437, %v1073
        %v1075 = vand.u32 %v1074, 4294901760
        %1076 = vmatpush1.msra.mxu0 %v1075
        %1077 = vmatprep.subr.mxu0 0.0
        %v1078 = vand.u32 %v438, 4294901760
        %v1079 = vsub.f32 %v438, %v1078
        %v1080 = vand.u32 %v1079, 4294901760
        %1081 = vmatpush1.msra.mxu0 %v1080
        %1082 = vmatprep.subr.mxu0 0.0
        %v1083 = vand.u32 %v439, 4294901760
        %v1084 = vsub.f32 %v439, %v1083
        %v1085 = vand.u32 %v1084, 4294901760
        %1086 = vmatpush1.msra.mxu0 %v1085
        %1087 = vmatprep.subr.mxu0 0.0
        %v1088 = vand.u32 %v440, 4294901760
        %v1089 = vsub.f32 %v440, %v1088
        %v1090 = vand.u32 %v1089, 4294901760
        %1091 = vmatpush1.msra.mxu0 %v1090
        %1092 = vmatprep.subr.mxu0 0.0
        %v1093 = vand.u32 %v441, 4294901760
        %v1094 = vsub.f32 %v441, %v1093
        %v1095 = vand.u32 %v1094, 4294901760
        %1096 = vmatpush1.msra.mxu0 %v1095
        %1097 = vmatprep.subr.mxu0 0.0
        %v1098 = vand.u32 %v442, 4294901760
        %v1099 = vsub.f32 %v442, %v1098
        %v1100 = vand.u32 %v1099, 4294901760
        %1101 = vmatpush1.msra.mxu0 %v1100
        %1102 = vmatprep.subr.mxu0 0.0
        %v1103 = vand.u32 %v443, 4294901760
        %v1104 = vsub.f32 %v443, %v1103
        %v1105 = vand.u32 %v1104, 4294901760
        %1106 = vmatpush1.msra.mxu0 %v1105
        %1107 = vmatprep.subr.mxu0 0.0
        %v1108 = vand.u32 %v444, 4294901760
        %v1109 = vsub.f32 %v444, %v1108
        %v1110 = vand.u32 %v1109, 4294901760
        %1111 = vmatpush1.msra.mxu0 %v1110
        %1112 = vmatprep.subr.mxu0 0.0
        %v1113 = vand.u32 %v445, 4294901760
        %v1114 = vsub.f32 %v445, %v1113
        %v1115 = vand.u32 %v1114, 4294901760
        %1116 = vmatpush1.msra.mxu0 %v1115
        %1117 = vmatprep.subr.mxu0 0.0
        %v1118 = vand.u32 %v446, 4294901760
        %v1119 = vsub.f32 %v446, %v1118
        %v1120 = vand.u32 %v1119, 4294901760
        %1121 = vmatpush1.msra.mxu0 %v1120
        %1122 = vmatprep.subr.mxu0 0.0
        %v1123 = vand.u32 %v447, 4294901760
        %v1124 = vsub.f32 %v447, %v1123
        %v1125 = vand.u32 %v1124, 4294901760
        %1126 = vmatpush1.msra.mxu0 %v1125
        %1127 = vmatprep.subr.mxu0 0.0
        %v1128 = vand.u32 %v448, 4294901760
        %v1129 = vsub.f32 %v448, %v1128
        %v1130 = vand.u32 %v1129, 4294901760
        %1131 = vmatpush1.msra.mxu0 %v1130
        %1132 = vmatprep.subr.mxu0 0.0
        %v1133 = vand.u32 %v449, 4294901760
        %v1134 = vsub.f32 %v449, %v1133
        %v1135 = vand.u32 %v1134, 4294901760
        %1136 = vmatpush1.msra.mxu0 %v1135
        %1137 = vmatprep.subr.mxu0 0.0
        %v1138 = vand.u32 %v450, 4294901760
        %v1139 = vsub.f32 %v450, %v1138
        %v1140 = vand.u32 %v1139, 4294901760
        %1141 = vmatpush1.msra.mxu0 %v1140
        %1142 = vmatprep.subr.mxu0 0.0
        %v1143 = vand.u32 %v451, 4294901760
        %v1144 = vsub.f32 %v451, %v1143
        %v1145 = vand.u32 %v1144, 4294901760
        %1146 = vmatpush1.msra.mxu0 %v1145
        %1147 = vmatprep.subr.mxu0 0.0
        %v1148 = vand.u32 %v452, 4294901760
        %v1149 = vsub.f32 %v452, %v1148
        %v1150 = vand.u32 %v1149, 4294901760
        %1151 = vmatpush1.msra.mxu0 %v1150
        %1152 = vmatprep.subr.mxu0 0.0
        %v1153 = vand.u32 %v453, 4294901760
        %v1154 = vsub.f32 %v453, %v1153
        %v1155 = vand.u32 %v1154, 4294901760
        %1156 = vmatpush1.msra.mxu0 %v1155
        %1157 = vmatprep.subr.mxu0 0.0
        %v1158 = vand.u32 %v454, 4294901760
        %v1159 = vsub.f32 %v454, %v1158
        %v1160 = vand.u32 %v1159, 4294901760
        %1161 = vmatpush1.msra.mxu0 %v1160
        %1162 = vmatprep.subr.mxu0 0.0
        %v1163 = vand.u32 %v455, 4294901760
        %v1164 = vsub.f32 %v455, %v1163
        %v1165 = vand.u32 %v1164, 4294901760
        %1166 = vmatpush1.msra.mxu0 %v1165
        %1167 = vmatprep.subr.mxu0 0.0
        %v1168 = vand.u32 %v456, 4294901760
        %v1169 = vsub.f32 %v456, %v1168
        %v1170 = vand.u32 %v1169, 4294901760
        %1171 = vmatpush1.msra.mxu0 %v1170
        %1172 = vmatprep.subr.mxu0 0.0
        %v1173 = vand.u32 %v457, 4294901760
        %v1174 = vsub.f32 %v457, %v1173
        %v1175 = vand.u32 %v1174, 4294901760
        %1176 = vmatpush1.msra.mxu0 %v1175
        %1177 = vmatprep.subr.mxu0 0.0
        %v1178 = vand.u32 %v458, 4294901760
        %v1179 = vsub.f32 %v458, %v1178
        %v1180 = vand.u32 %v1179, 4294901760
        %1181 = vmatpush1.msra.mxu0 %v1180
        %1182 = vmatprep.subr.mxu0 0.0
        %v1183 = vand.u32 %v459, 4294901760
        %v1184 = vsub.f32 %v459, %v1183
        %v1185 = vand.u32 %v1184, 4294901760
        %1186 = vmatpush1.msra.mxu0 %v1185
        %1187 = vmatprep.subr.mxu0 0.0
        %v1188 = vand.u32 %v460, 4294901760
        %v1189 = vsub.f32 %v460, %v1188
        %v1190 = vand.u32 %v1189, 4294901760
        %1191 = vmatpush1.msra.mxu0 %v1190
        %1192 = vmatprep.subr.mxu0 0.0
        %v1193 = vand.u32 %v461, 4294901760
        %v1194 = vsub.f32 %v461, %v1193
        %v1195 = vand.u32 %v1194, 4294901760
        %1196 = vmatpush1.msra.mxu0 %v1195
        %1197 = vmatprep.subr.mxu0 0.0
        %v1198 = vand.u32 %v462, 4294901760
        %v1199 = vsub.f32 %v462, %v1198
        %v1200 = vand.u32 %v1199, 4294901760
        %1201 = vmatpush1.msra.mxu0 %v1200
        %1202 = vmatprep.subr.mxu0 0.0
        %v1203 = vand.u32 %v463, 4294901760
        %v1204 = vsub.f32 %v463, %v1203
        %v1205 = vand.u32 %v1204, 4294901760
        %1206 = vmatpush1.msra.mxu0 %v1205
        %1207 = vmatprep.mubr.f32.mxu0 %v336
        %1208 = vmatmul.mubr.f32.gmra.mrb[0].mxu0 %v335
        %v1209 = vpop.f32.mrb[0].mxu0
        %v1210 = vadd.f32 %v1044, %v1209
        %v1211 = vpop.f32.mrb[0].mxu0
        %1212 = vdwg.mxu0
        %1213 = vmatprep.subr.mxu0 0.0
        %v1214 = vand.u32 %v432, 4294901760
        %1215 = vmatpush1.msra.mxu0 %v1214
        %1216 = vmatprep.subr.mxu0 0.0
        %v1217 = vand.u32 %v433, 4294901760
        %1218 = vmatpush1.msra.mxu0 %v1217
        %1219 = vmatprep.subr.mxu0 0.0
        %v1220 = vand.u32 %v434, 4294901760
        %1221 = vmatpush1.msra.mxu0 %v1220
        %1222 = vmatprep.subr.mxu0 0.0
        %v1223 = vand.u32 %v435, 4294901760
        %1224 = vmatpush1.msra.mxu0 %v1223
        %1225 = vmatprep.subr.mxu0 0.0
        %v1226 = vand.u32 %v436, 4294901760
        %1227 = vmatpush1.msra.mxu0 %v1226
        %1228 = vmatprep.subr.mxu0 0.0
        %v1229 = vand.u32 %v437, 4294901760
        %1230 = vmatpush1.msra.mxu0 %v1229
        %1231 = vmatprep.subr.mxu0 0.0
        %v1232 = vand.u32 %v438, 4294901760
        %1233 = vmatpush1.msra.mxu0 %v1232
        %1234 = vmatprep.subr.mxu0 0.0
        %v1235 = vand.u32 %v439, 4294901760
        %1236 = vmatpush1.msra.mxu0 %v1235
        %1237 = vmatprep.subr.mxu0 0.0
        %v1238 = vand.u32 %v440, 4294901760
        %1239 = vmatpush1.msra.mxu0 %v1238
        %1240 = vmatprep.subr.mxu0 0.0
        %v1241 = vand.u32 %v441, 4294901760
        %1242 = vmatpush1.msra.mxu0 %v1241
        %1243 = vmatprep.subr.mxu0 0.0
        %v1244 = vand.u32 %v442, 4294901760
        %1245 = vmatpush1.msra.mxu0 %v1244
        %1246 = vmatprep.subr.mxu0 0.0
        %v1247 = vand.u32 %v443, 4294901760
        %1248 = vmatpush1.msra.mxu0 %v1247
        %1249 = vmatprep.subr.mxu0 0.0
        %v1250 = vand.u32 %v444, 4294901760
        %1251 = vmatpush1.msra.mxu0 %v1250
        %1252 = vmatprep.subr.mxu0 0.0
        %v1253 = vand.u32 %v445, 4294901760
        %1254 = vmatpush1.msra.mxu0 %v1253
        %1255 = vmatprep.subr.mxu0 0.0
        %v1256 = vand.u32 %v446, 4294901760
        %1257 = vmatpush1.msra.mxu0 %v1256
        %1258 = vmatprep.subr.mxu0 0.0
        %v1259 = vand.u32 %v447, 4294901760
        %1260 = vmatpush1.msra.mxu0 %v1259
        %1261 = vmatprep.subr.mxu0 0.0
        %v1262 = vand.u32 %v448, 4294901760
        %1263 = vmatpush1.msra.mxu0 %v1262
        %1264 = vmatprep.subr.mxu0 0.0
        %v1265 = vand.u32 %v449, 4294901760
        %1266 = vmatpush1.msra.mxu0 %v1265
        %1267 = vmatprep.subr.mxu0 0.0
        %v1268 = vand.u32 %v450, 4294901760
        %1269 = vmatpush1.msra.mxu0 %v1268
        %1270 = vmatprep.subr.mxu0 0.0
        %v1271 = vand.u32 %v451, 4294901760
        %1272 = vmatpush1.msra.mxu0 %v1271
        %1273 = vmatprep.subr.mxu0 0.0
        %v1274 = vand.u32 %v452, 4294901760
        %1275 = vmatpush1.msra.mxu0 %v1274
        %1276 = vmatprep.subr.mxu0 0.0
        %v1277 = vand.u32 %v453, 4294901760
        %1278 = vmatpush1.msra.mxu0 %v1277
        %1279 = vmatprep.subr.mxu0 0.0
        %v1280 = vand.u32 %v454, 4294901760
        %1281 = vmatpush1.msra.mxu0 %v1280
        %1282 = vmatprep.subr.mxu0 0.0
        %v1283 = vand.u32 %v455, 4294901760
        %1284 = vmatpush1.msra.mxu0 %v1283
        %1285 = vmatprep.subr.mxu0 0.0
        %v1286 = vand.u32 %v456, 4294901760
        %1287 = vmatpush1.msra.mxu0 %v1286
        %1288 = vmatprep.subr.mxu0 0.0
        %v1289 = vand.u32 %v457, 4294901760
        %1290 = vmatpush1.msra.mxu0 %v1289
        %1291 = vmatprep.subr.mxu0 0.0
        %v1292 = vand.u32 %v458, 4294901760
        %1293 = vmatpush1.msra.mxu0 %v1292
        %1294 = vmatprep.subr.mxu0 0.0
        %v1295 = vand.u32 %v459, 4294901760
        %1296 = vmatpush1.msra.mxu0 %v1295
        %1297 = vmatprep.subr.mxu0 0.0
        %v1298 = vand.u32 %v460, 4294901760
        %1299 = vmatpush1.msra.mxu0 %v1298
        %1300 = vmatprep.subr.mxu0 0.0
        %v1301 = vand.u32 %v461, 4294901760
        %1302 = vmatpush1.msra.mxu0 %v1301
        %1303 = vmatprep.subr.mxu0 0.0
        %v1304 = vand.u32 %v462, 4294901760
        %1305 = vmatpush1.msra.mxu0 %v1304
        %1306 = vmatprep.subr.mxu0 0.0
        %v1307 = vand.u32 %v463, 4294901760
        %1308 = vmatpush1.msra.mxu0 %v1307
        %1309 = vmatprep.mubr.f32.mxu0 %v336
        %1310 = vmatmul.mubr.f32.gmra.mrb[0].mxu0 %v335
        %v1311 = vpop.f32.mrb[0].mxu0
        %v1312 = vadd.f32 %v1210, %v1311
        %v1313 = vpop.f32.mrb[0].mxu0
        %1314 = vdwg.mxu0
        %v1315 = vadd.f32 %v464, %v1312
        %vm1316 = vcmask 261120
        %1317 = vst.msk [vmem:[#allocation2] sm:$0xff] %vm1316, %v1315
        %v1318 = vld [vmem:[#allocation3] sm:$0xff]
        %v1319 = vadd.f32 %v335, %v336
        %1320 = vadd.xlane.f32.xlu0 %v1319
        %v1321 = vpop.xlane.xlu0 %1320
        %v1322 = vadd.f32 %v1318, %v1321
        %vm1323 = vcmask 7168
        %1324 = vst.msk [vmem:[#allocation3] sm:$0xff] %vm1323, %v1322
        %p1325 = scmp.eq.s32.totalorder %s21, 1
        // Predicated region
        $region33: #{tpu_custom_call.1} parent=27 // pred_check
          %p1326 = pneg %p1325
        $region34: #{tpu_custom_call.1} parent=27 // pred_check_branch
          %1328 = sbr.rel (%p1326) target = $region36
        $region35: #{tpu_custom_call.1} parent=27 // pred_region
          %v1329 = vld [vmem:[#allocation2] sm:$0xff]
          %1330 = vst.msk [vmem:[#allocation4] sm:$0xff] %vm1316, %v1329
          %v1331 = vld [vmem:[#allocation3] sm:$0xff]
          %1332 = vst.msk [vmem:[%s301] sm:$0xff] %vm1323, %v1331
        $region36: #{tpu_custom_call.1} parent=27 // pred_fallthru
          _
        %p1333 = scmp.lt.s32.totalorder %s20, 0
        %s1334 = scalar_select %p1333, %s20, 0
        %s1335 = smul.addr %s1334, 8
        %s1336 = scalar_lea.vmem %s3, %s1335
        // Predicated region
        $region37: #{tpu_custom_call.1} parent=27 // pred_check
          %p1337 = pneg %p114
        $region38: #{tpu_custom_call.1} parent=27 // pred_check_branch
          %1339 = sbr.rel (%p1337) target = $region40
        $region39: #{tpu_custom_call.1} parent=27 // pred_region
          %s1341 = ssub.s32 128, 128
          %1342 = vsyncadd [#allocation5], %s1341
          %s1343 = smul.addr %s20, 128
          %s1344 = scalar_lea.hbm %s2, %s1343
          %s1346 = sshll.u32 [#allocation4], 4
          %s1347 = int_to_ptr.vmem [resolvable:$true] %s1346
          %1349 = dma.vmem_to_hbm [thread:$0]  %s1347, 128, %s1344, [#allocation5]
        $region40: #{tpu_custom_call.1} parent=27 // pred_fallthru
          _
        // Predicated region
        $region41: #{tpu_custom_call.1} parent=27 // pred_check
          %p1350 = pneg %p140
        $region42: #{tpu_custom_call.1} parent=27 // pred_check_branch
          %1352 = sbr.rel (%p1350) target = $region44
        $region43: #{tpu_custom_call.1} parent=27 // pred_region
          _
        $region44: #{tpu_custom_call.1} parent=27 // pred_fallthru
          _
        // Predicated region
        $region45: #{tpu_custom_call.1} parent=27 // pred_check
          %p1353 = pneg %p114
        $region46: #{tpu_custom_call.1} parent=27 // pred_check_branch
          %1355 = sbr.rel (%p1353) target = $region48
        $region47: #{tpu_custom_call.1} parent=27 // pred_region
          %1356 = dma.done [#allocation5], 128
        $region48: #{tpu_custom_call.1} parent=27 // pred_fallthru
          _
        // Predicated region
        $region49: #{tpu_custom_call.1} parent=27 // pred_check
          %p1357 = pneg %p140
        $region50: #{tpu_custom_call.1} parent=27 // pred_check_branch
          %1359 = sbr.rel (%p1357) target = $region52
        $region51: #{tpu_custom_call.1} parent=27 // pred_region
          %p1360 = scmp.lt.s32.totalorder %s20, 0
          %s1361 = scalar_select %p1360, %s20, 0
          %s1362 = smul.addr %s1361, 8
          %s1363 = scalar_lea.vmem %s3, %s1362
        $region52: #{tpu_custom_call.1} parent=27 // pred_fallthru
          _
      $region28: #{tpu_custom_call.1} parent=5 // pred_fallthru
        _
      %p1364 = scmp.le.s32.totalorder 2, %s11
      // Predicated region
      $region53: #{tpu_custom_call.1} parent=5 // pred_check
        %p1365 = pneg %p1364
      $region54: #{tpu_custom_call.1} parent=5 // pred_check_branch
        %1367 = sbr.rel (%p1365) target = $region56
      $region55: #{tpu_custom_call.1} parent=5 // pred_region
        %s1368 = ssub.s32 %s11, 2
      $region56: #{tpu_custom_call.1} parent=5 // pred_fallthru
        _
    $region6: #{tpu_custom_call.1} parent=1 // loop_footer
      %s15 = sadd.s32 1, %s11
    $region7: #{tpu_custom_call.1} parent=1 // loop_footer_branch
      %10 = sbr.rel target = $region3
    $region8: #{tpu_custom_call.1} parent=1 // loop_exit
      _
    %1369 = vsyncpa [#allocation5], 1
    %s1370 = scalar_lea.sflag [#allocation5], 1
    %1371 = vsyncpa %s1370, 1

</llo_original>
